<compile_context>
chip_gen: v6e
topology: v6e:2x2x1
jax: 0.10.0
libtpu: 0.0.40
codegen_flags: <defaults>
</compile_context>

<pallas_src>
import functools

import jax
import jax.numpy as jnp
from jax import lax
from jax.experimental import pallas as pl
from jax.experimental.pallas import tpu as pltpu

_CIFAR_MEAN = (0.4914, 0.4822, 0.4465)
_CIFAR_STD = (0.247, 0.243, 0.261)


def _round_up(x, m):
    return ((x + m - 1) // m) * m


def _pgd_kernel(*refs, step_size, num_steps, norm):
    if norm:
        (x0_ref, lo_ref, hi_ref, onehot_ref, w_ref, wt_ref, b_ref,
         mean_ref, inv_std_ref, logits_ref, xnorm_ref) = refs
    else:
        (x0_ref, lo_ref, hi_ref, onehot_ref, w_ref, wt_ref, b_ref,
         logits_ref, xnorm_ref) = refs

    x      = x0_ref[...]        # [TB, D]  f32 (random-start perturbed)
    lo     = lo_ref[...]        # [TB, D]  f32  max(inputs - eps, 0)
    hi     = hi_ref[...]        # [TB, D]  f32  min(inputs + eps, 1)
    onehot = onehot_ref[...]    # [TB, CP] f32 (padded classes all-zero)
    w      = w_ref[...]         # [D, CP]  bf16 (norm pre-folded, class-padded)
    wt     = wt_ref[...]        # [CP, D]  bf16 (transpose hoisted to wrapper)
    b      = b_ref[...]         # [1, CP]  f32  (-1e30 on padded classes)

    step = jnp.float32(step_size)

    def pgd_step(xv):
        # forward: logits (padded classes pinned to -1e30 -> softmax prob 0)
        logits = jnp.dot(xv.astype(jnp.bfloat16), w,
                         preferred_element_type=jnp.float32) + b
        m = jnp.max(logits, axis=-1, keepdims=True)
        e = jnp.exp(logits - m)
        p = e * pl.reciprocal(jnp.sum(e, axis=-1, keepdims=True), approx=True)
        # softmax cross-entropy gradient wrt logits ~ (softmax - onehot);
        # 1/B mean factor dropped (sign-invariant).
        g_logits = p - onehot
        # dL/dx = g_logits @ W^T  (padded-class rows of W^T are zero)
        grad_x = jnp.dot(g_logits.astype(jnp.bfloat16), wt,
                         preferred_element_type=jnp.float32)
        # single-select fused sign*step (grad==0 steps +step; clamp bounds it)
        xv = xv + jnp.where(grad_x >= 0.0, step, -step)
        # single projection: eps-ball and [0,1] pre-folded into lo/hi
        return jnp.minimum(jnp.maximum(xv, lo), hi)

    if num_steps <= 32:
        for _ in range(num_steps):          # full unroll for small step counts
            x = pgd_step(x)
    else:
        x = lax.fori_loop(0, num_steps, lambda i, xv: pgd_step(xv), x, unroll=8)

    # final forward pass with folded weights (== basic_net(normalize(x)))
    logits_ref[...] = jnp.dot(x.astype(jnp.bfloat16), w,
                              preferred_element_type=jnp.float32) + b
    if norm:
        xnorm_ref[...] = (x - mean_ref[...]) * inv_std_ref[...]
    else:
        xnorm_ref[...] = x


def attack_pgd(inputs, targets, W, b, *, epsilon=8.0 / 255.0,
               step_size=2.0 / 255.0, num_steps=5, random_start=True,
               norm=False, num_classes=10, key=None, batch_tile=256):
    """Returns (logits, x_norm), mirroring AttackPGD.forward -> (x_out, x_norm).

    batch_tile: rows per grid step. Keep <= ~1024 on v7x (64 MiB VMEM); larger
    tiles are fine on v5e/v6e. It is clamped to the (8-aligned) batch size.
    """
    B, C, H, Wd = inputs.shape
    D = C * H * Wd
    assert D % 128 == 0, "flattened feature dim must be a multiple of 128"
    CP = 128  # class dim padded to one full lane vreg

    # ---- batch padding / tiling (grid over batch tiles) ----
    batch_tile = min(int(batch_tile), _round_up(B, 8))
    batch_tile = _round_up(batch_tile, 8)
    B_pad = _round_up(B, batch_tile)
    n_tiles = B_pad // batch_tile

    x_flat = inputs.reshape(B, D).astype(jnp.float32)
    x_flat = jnp.pad(x_flat, ((0, B_pad - B), (0, 0)))

    if random_start:
        if key is None:
            key = jax.random.PRNGKey(0)
        noise = jax.random.uniform(key, (B_pad, D), jnp.float32, -epsilon, epsilon)
        x0 = x_flat + noise
    else:
        x0 = x_flat

    # pre-folded projection bounds (valid because inputs are in [0, 1])
    lo = jnp.maximum(x_flat - epsilon, 0.0)
    hi = jnp.minimum(x_flat + epsilon, 1.0)

    targets_pad = jnp.pad(targets.astype(jnp.int32), (0, B_pad - B))
    onehot = jax.nn.one_hot(targets_pad, CP, dtype=jnp.float32)

    mean = jnp.asarray(_CIFAR_MEAN, jnp.float32)
    std = jnp.asarray(_CIFAR_STD, jnp.float32)
    mean_flat = jnp.repeat(mean, H * Wd).reshape(1, D)
    inv_std_flat = (1.0 / jnp.repeat(std, H * Wd)).reshape(1, D)

    Wf = W.astype(jnp.float32)
    bf = b.reshape(1, num_classes).astype(jnp.float32)
    if norm:
        # logits = ((x - mean)/std) @ W + b  ==  x @ W' + b'
        W_eff = Wf * inv_std_flat.reshape(D, 1)
        b_eff = bf - jnp.dot(mean_flat * inv_std_flat, Wf)
    else:
        W_eff, b_eff = Wf, bf

    # pad class dim to 128: zero weight cols, -1e30 bias -> softmax prob / grad == 0
    W_pad = jnp.pad(W_eff, ((0, 0), (0, CP - num_classes)))
    b_pad = jnp.concatenate(
        [b_eff, jnp.full((1, CP - num_classes), -1e30, jnp.float32)], axis=-1)

    w_bf = W_pad.astype(jnp.bfloat16)        # [D, CP]
    wt_bf = W_pad.T.astype(jnp.bfloat16)     # [CP, D]  transpose hoisted here

    kernel = functools.partial(_pgd_kernel, step_size=float(step_size),
                               num_steps=int(num_steps), norm=bool(norm))

    row_spec = pl.BlockSpec((batch_tile, D), lambda i: (i, 0))
    cls_spec = pl.BlockSpec((batch_tile, CP), lambda i: (i, 0))

    def rep(shape):  # replicated across grid -> DMA'd once, kept resident
        return pl.BlockSpec(shape, lambda i: (0, 0))

    in_specs = [row_spec, row_spec, row_spec, cls_spec,
                rep((D, CP)), rep((CP, D)), rep((1, CP))]
    args = [x0, lo, hi, onehot, w_bf, wt_bf, b_pad]
    if norm:
        in_specs += [rep((1, D)), rep((1, D))]
        args += [mean_flat, inv_std_flat]

    # when norm=False the adversarial x IS the x_norm output -> reuse x0's buffer
    io_aliases = {} if norm else {0: 1}

    logits_pad, x_out_flat = pl.pallas_call(
        kernel,
        grid_spec=pltpu.PrefetchScalarGridSpec(
            num_scalar_prefetch=0,
            grid=(n_tiles,),
            in_specs=in_specs,
            out_specs=(cls_spec, row_spec)),
        out_shape=(jax.ShapeDtypeStruct((B_pad, CP), jnp.float32),
                   jax.ShapeDtypeStruct((B_pad, D), jnp.float32)),
        input_output_aliases=io_aliases,
        compiler_params=pltpu.CompilerParams(
            dimension_semantics=("parallel",),
            vmem_limit_bytes=64 * 1024 * 1024),
    )(*args)

    logits = logits_pad[:B, :num_classes]
    x_norm = x_out_flat[:B].reshape(B, C, H, Wd)
    return logits, x_norm


# TODO(synk): the optional `self.optimizer` training-time weight update branch
# (loss.backward() on net params) has no place in this inference-style kernel.

if __name__ == "__main__":
    key = jax.random.PRNGKey(0)
    k_x, k_t, k_w, k_noise, k_x2, k_t2 = jax.random.split(key, 6)

    B, C, H, Wd = 2, 3, 16, 16
    D = C * H * Wd
    num_classes = 10

    inputs = jax.random.uniform(k_x, (B, C, H, Wd), jnp.float32, 0.0, 1.0)
    targets = jax.random.randint(k_t, (B,), 0, num_classes)

    # deterministic "basic_net" parameters (linear classifier)
    W = 0.02 * jax.random.normal(k_w, (D, num_classes), jnp.float32)
    b = jnp.zeros((num_classes,), jnp.float32)

    logits, x_norm = attack_pgd(
        inputs, targets, W, b,
        epsilon=8.0 / 255.0, step_size=2.0 / 255.0, num_steps=5,
        random_start=True, norm=False, key=k_noise)
    jax.block_until_ready((logits, x_norm))
    assert logits.shape == (B, num_classes)
    assert x_norm.shape == (B, C, H, Wd)
    assert bool(jnp.all(jnp.isfinite(logits)))
    assert bool(jnp.all((x_norm >= 0.0) & (x_norm <= 1.0)))

    # exercise the multi-tile grid + norm=True path on a slightly larger batch
    B2 = 20
    inputs2 = jax.random.uniform(k_x2, (B2, C, H, Wd), jnp.float32, 0.0, 1.0)
    targets2 = jax.random.randint(k_t2, (B2,), 0, num_classes)
    logits2, x_norm2 = attack_pgd(
        inputs2, targets2, W, b,
        epsilon=8.0 / 255.0, step_size=2.0 / 255.0, num_steps=5,
        random_start=True, norm=True, key=k_noise, batch_tile=8)
    jax.block_until_ready((logits2, x_norm2))
    assert logits2.shape == (B2, num_classes)
    assert x_norm2.shape == (B2, C, H, Wd)
    assert bool(jnp.all(jnp.isfinite(logits2)))

    print("KERNEL_OK")
</pallas_src>

<mosaic_0001>
module attributes {stable_mosaic.version = 11 : i64} {
  func.func @_pgd_kernel(%arg0: i32, %arg1: memref<8x768xf32, #tpu.memory_space<vmem>>, %arg2: memref<8x768xf32, #tpu.memory_space<vmem>>, %arg3: memref<8x768xf32, #tpu.memory_space<vmem>>, %arg4: memref<8x128xf32, #tpu.memory_space<vmem>>, %arg5: memref<768x128xbf16, #tpu.memory_space<vmem>>, %arg6: memref<128x768xbf16, #tpu.memory_space<vmem>>, %arg7: memref<1x128xf32, #tpu.memory_space<vmem>>, %arg8: memref<8x128xf32, #tpu.memory_space<vmem>>, %arg9: memref<8x768xf32, #tpu.memory_space<vmem>>) attributes {dimension_semantics = [#tpu.dimension_semantics<parallel>], iteration_bounds = array<i64: 1>, scalar_prefetch = 0 : i64, scratch_operands = 0 : i64, tpu.core_type = #tpu.core_type<tc>, window_params = [{transform_indices = @transform_0, window_bounds = array<i64: 8, 768>}, {transform_indices = @transform_1, window_bounds = array<i64: 8, 768>}, {transform_indices = @transform_2, window_bounds = array<i64: 8, 768>}, {transform_indices = @transform_3, window_bounds = array<i64: 8, 128>}, {pipeline_mode = #tpu.pipeline_mode<synchronous>, transform_indices = @transform_4, window_bounds = array<i64: 768, 128>}, {pipeline_mode = #tpu.pipeline_mode<synchronous>, transform_indices = @transform_5, window_bounds = array<i64: 128, 768>}, {pipeline_mode = #tpu.pipeline_mode<synchronous>, transform_indices = @transform_6, window_bounds = array<i64: 1, 128>}, {transform_indices = @transform_7, window_bounds = array<i64: 8, 128>}, {transform_indices = @transform_8, window_bounds = array<i64: 8, 768>}]} {
    %c0 = arith.constant 0 : index
    %c0_0 = arith.constant 0 : index
    %0 = vector.load %arg1[%c0, %c0_0] : memref<8x768xf32, #tpu.memory_space<vmem>>, vector<8x768xf32>
    %c0_1 = arith.constant 0 : index
    %c0_2 = arith.constant 0 : index
    %1 = vector.load %arg2[%c0_1, %c0_2] : memref<8x768xf32, #tpu.memory_space<vmem>>, vector<8x768xf32>
    %c0_3 = arith.constant 0 : index
    %c0_4 = arith.constant 0 : index
    %2 = vector.load %arg3[%c0_3, %c0_4] : memref<8x768xf32, #tpu.memory_space<vmem>>, vector<8x768xf32>
    %c0_5 = arith.constant 0 : index
    %c0_6 = arith.constant 0 : index
    %3 = vector.load %arg4[%c0_5, %c0_6] : memref<8x128xf32, #tpu.memory_space<vmem>>, vector<8x128xf32>
    %c0_7 = arith.constant 0 : index
    %c0_8 = arith.constant 0 : index
    %4 = vector.load %arg5[%c0_7, %c0_8] : memref<768x128xbf16, #tpu.memory_space<vmem>>, vector<768x128xbf16>
    %c0_9 = arith.constant 0 : index
    %c0_10 = arith.constant 0 : index
    %5 = vector.load %arg6[%c0_9, %c0_10] : memref<128x768xbf16, #tpu.memory_space<vmem>>, vector<128x768xbf16>
    %c0_11 = arith.constant 0 : index
    %c0_12 = arith.constant 0 : index
    %6 = vector.load %arg7[%c0_11, %c0_12] : memref<1x128xf32, #tpu.memory_space<vmem>>, vector<1x128xf32>
    %7 = arith.truncf %0 : vector<8x768xf32> to vector<8x768xbf16>
    %cst = arith.constant dense<0.000000e+00> : vector<8x128xf32>
    %8 = tpu.matmul %7, %4, %cst {dimension_numbers = #tpu.dot_dimension_numbers<[1], [0], [0], [1], [0, 0, 1, 1], [], []>} : vector<8x768xbf16>, vector<768x128xbf16>, vector<8x128xf32> -> vector<8x128xf32>
    %9 = vector.broadcast %6 : vector<1x128xf32> to vector<8x128xf32>
    %10 = arith.addf %8, %9 : vector<8x128xf32>
    %cst_13 = arith.constant dense<0xFF800000> : vector<8xf32>
    %11 = vector.multi_reduction <maximumf>, %10, %cst_13 [1] : vector<8x128xf32> to vector<8xf32>
    %12 = vector.shape_cast %11 : vector<8xf32> to vector<8x1xf32>
    %13 = vector.broadcast %12 : vector<8x1xf32> to vector<8x128xf32>
    %14 = arith.subf %10, %13 : vector<8x128xf32>
    %15 = math.exp %14 : vector<8x128xf32>
    %cst_14 = arith.constant dense<0.000000e+00> : vector<8xf32>
    %16 = vector.multi_reduction <add>, %15, %cst_14 [1] : vector<8x128xf32> to vector<8xf32>
    %17 = vector.shape_cast %16 : vector<8xf32> to vector<8x1xf32>
    %18 = tpu.reciprocal %17 {approx = true} : vector<8x1xf32> -> vector<8x1xf32>
    %19 = vector.broadcast %18 : vector<8x1xf32> to vector<8x128xf32>
    %20 = arith.mulf %15, %19 : vector<8x128xf32>
    %21 = arith.subf %20, %3 : vector<8x128xf32>
    %22 = arith.truncf %21 : vector<8x128xf32> to vector<8x128xbf16>
    %cst_15 = arith.constant dense<0.000000e+00> : vector<8x768xf32>
    %23 = tpu.matmul %22, %5, %cst_15 {dimension_numbers = #tpu.dot_dimension_numbers<[1], [0], [0], [1], [0, 0, 1, 1], [], []>} : vector<8x128xbf16>, vector<128x768xbf16>, vector<8x768xf32> -> vector<8x768xf32>
    %cst_16 = arith.constant 0.000000e+00 : f32
    %24 = vector.broadcast %cst_16 : f32 to vector<8x768xf32>
    %25 = arith.cmpf oge, %23, %24 : vector<8x768xf32>
    %cst_17 = arith.constant 0.000000e+00 : f32
    %cst_18 = arith.constant 0.00784313772 : f32
    %26 = arith.subf %cst_17, %cst_18 : f32
    %cst_19 = arith.constant 0.00784313772 : f32
    %27 = vector.broadcast %cst_19 : f32 to vector<8x768xf32>
    %28 = vector.broadcast %26 : f32 to vector<8x768xf32>
    %29 = arith.select %25, %27, %28 : vector<8x768xi1>, vector<8x768xf32>
    %30 = arith.addf %0, %29 : vector<8x768xf32>
    %31 = arith.maximumf %30, %1 : vector<8x768xf32>
    %32 = arith.minimumf %31, %2 : vector<8x768xf32>
    %33 = arith.truncf %32 : vector<8x768xf32> to vector<8x768xbf16>
    %cst_20 = arith.constant dense<0.000000e+00> : vector<8x128xf32>
    %34 = tpu.matmul %33, %4, %cst_20 {dimension_numbers = #tpu.dot_dimension_numbers<[1], [0], [0], [1], [0, 0, 1, 1], [], []>} : vector<8x768xbf16>, vector<768x128xbf16>, vector<8x128xf32> -> vector<8x128xf32>
    %35 = vector.broadcast %6 : vector<1x128xf32> to vector<8x128xf32>
    %36 = arith.addf %34, %35 : vector<8x128xf32>
    %cst_21 = arith.constant dense<0xFF800000> : vector<8xf32>
    %37 = vector.multi_reduction <maximumf>, %36, %cst_21 [1] : vector<8x128xf32> to vector<8xf32>
    %38 = vector.shape_cast %37 : vector<8xf32> to vector<8x1xf32>
    %39 = vector.broadcast %38 : vector<8x1xf32> to vector<8x128xf32>
    %40 = arith.subf %36, %39 : vector<8x128xf32>
    %41 = math.exp %40 : vector<8x128xf32>
    %cst_22 = arith.constant dense<0.000000e+00> : vector<8xf32>
    %42 = vector.multi_reduction <add>, %41, %cst_22 [1] : vector<8x128xf32> to vector<8xf32>
    %43 = vector.shape_cast %42 : vector<8xf32> to vector<8x1xf32>
    %44 = tpu.reciprocal %43 {approx = true} : vector<8x1xf32> -> vector<8x1xf32>
    %45 = vector.broadcast %44 : vector<8x1xf32> to vector<8x128xf32>
    %46 = arith.mulf %41, %45 : vector<8x128xf32>
    %47 = arith.subf %46, %3 : vector<8x128xf32>
    %48 = arith.truncf %47 : vector<8x128xf32> to vector<8x128xbf16>
    %cst_23 = arith.constant dense<0.000000e+00> : vector<8x768xf32>
    %49 = tpu.matmul %48, %5, %cst_23 {dimension_numbers = #tpu.dot_dimension_numbers<[1], [0], [0], [1], [0, 0, 1, 1], [], []>} : vector<8x128xbf16>, vector<128x768xbf16>, vector<8x768xf32> -> vector<8x768xf32>
    %cst_24 = arith.constant 0.000000e+00 : f32
    %50 = vector.broadcast %cst_24 : f32 to vector<8x768xf32>
    %51 = arith.cmpf oge, %49, %50 : vector<8x768xf32>
    %cst_25 = arith.constant 0.000000e+00 : f32
    %cst_26 = arith.constant 0.00784313772 : f32
    %52 = arith.subf %cst_25, %cst_26 : f32
    %cst_27 = arith.constant 0.00784313772 : f32
    %53 = vector.broadcast %cst_27 : f32 to vector<8x768xf32>
    %54 = vector.broadcast %52 : f32 to vector<8x768xf32>
    %55 = arith.select %51, %53, %54 : vector<8x768xi1>, vector<8x768xf32>
    %56 = arith.addf %32, %55 : vector<8x768xf32>
    %57 = arith.maximumf %56, %1 : vector<8x768xf32>
    %58 = arith.minimumf %57, %2 : vector<8x768xf32>
    %59 = arith.truncf %58 : vector<8x768xf32> to vector<8x768xbf16>
    %cst_28 = arith.constant dense<0.000000e+00> : vector<8x128xf32>
    %60 = tpu.matmul %59, %4, %cst_28 {dimension_numbers = #tpu.dot_dimension_numbers<[1], [0], [0], [1], [0, 0, 1, 1], [], []>} : vector<8x768xbf16>, vector<768x128xbf16>, vector<8x128xf32> -> vector<8x128xf32>
    %61 = vector.broadcast %6 : vector<1x128xf32> to vector<8x128xf32>
    %62 = arith.addf %60, %61 : vector<8x128xf32>
    %cst_29 = arith.constant dense<0xFF800000> : vector<8xf32>
    %63 = vector.multi_reduction <maximumf>, %62, %cst_29 [1] : vector<8x128xf32> to vector<8xf32>
    %64 = vector.shape_cast %63 : vector<8xf32> to vector<8x1xf32>
    %65 = vector.broadcast %64 : vector<8x1xf32> to vector<8x128xf32>
    %66 = arith.subf %62, %65 : vector<8x128xf32>
    %67 = math.exp %66 : vector<8x128xf32>
    %cst_30 = arith.constant dense<0.000000e+00> : vector<8xf32>
    %68 = vector.multi_reduction <add>, %67, %cst_30 [1] : vector<8x128xf32> to vector<8xf32>
    %69 = vector.shape_cast %68 : vector<8xf32> to vector<8x1xf32>
    %70 = tpu.reciprocal %69 {approx = true} : vector<8x1xf32> -> vector<8x1xf32>
    %71 = vector.broadcast %70 : vector<8x1xf32> to vector<8x128xf32>
    %72 = arith.mulf %67, %71 : vector<8x128xf32>
    %73 = arith.subf %72, %3 : vector<8x128xf32>
    %74 = arith.truncf %73 : vector<8x128xf32> to vector<8x128xbf16>
    %cst_31 = arith.constant dense<0.000000e+00> : vector<8x768xf32>
    %75 = tpu.matmul %74, %5, %cst_31 {dimension_numbers = #tpu.dot_dimension_numbers<[1], [0], [0], [1], [0, 0, 1, 1], [], []>} : vector<8x128xbf16>, vector<128x768xbf16>, vector<8x768xf32> -> vector<8x768xf32>
    %cst_32 = arith.constant 0.000000e+00 : f32
    %76 = vector.broadcast %cst_32 : f32 to vector<8x768xf32>
    %77 = arith.cmpf oge, %75, %76 : vector<8x768xf32>
    %cst_33 = arith.constant 0.000000e+00 : f32
    %cst_34 = arith.constant 0.00784313772 : f32
    %78 = arith.subf %cst_33, %cst_34 : f32
    %cst_35 = arith.constant 0.00784313772 : f32
    %79 = vector.broadcast %cst_35 : f32 to vector<8x768xf32>
    %80 = vector.broadcast %78 : f32 to vector<8x768xf32>
    %81 = arith.select %77, %79, %80 : vector<8x768xi1>, vector<8x768xf32>
    %82 = arith.addf %58, %81 : vector<8x768xf32>
    %83 = arith.maximumf %82, %1 : vector<8x768xf32>
    %84 = arith.minimumf %83, %2 : vector<8x768xf32>
    %85 = arith.truncf %84 : vector<8x768xf32> to vector<8x768xbf16>
    %cst_36 = arith.constant dense<0.000000e+00> : vector<8x128xf32>
    %86 = tpu.matmul %85, %4, %cst_36 {dimension_numbers = #tpu.dot_dimension_numbers<[1], [0], [0], [1], [0, 0, 1, 1], [], []>} : vector<8x768xbf16>, vector<768x128xbf16>, vector<8x128xf32> -> vector<8x128xf32>
    %87 = vector.broadcast %6 : vector<1x128xf32> to vector<8x128xf32>
    %88 = arith.addf %86, %87 : vector<8x128xf32>
    %cst_37 = arith.constant dense<0xFF800000> : vector<8xf32>
    %89 = vector.multi_reduction <maximumf>, %88, %cst_37 [1] : vector<8x128xf32> to vector<8xf32>
    %90 = vector.shape_cast %89 : vector<8xf32> to vector<8x1xf32>
    %91 = vector.broadcast %90 : vector<8x1xf32> to vector<8x128xf32>
    %92 = arith.subf %88, %91 : vector<8x128xf32>
    %93 = math.exp %92 : vector<8x128xf32>
    %cst_38 = arith.constant dense<0.000000e+00> : vector<8xf32>
    %94 = vector.multi_reduction <add>, %93, %cst_38 [1] : vector<8x128xf32> to vector<8xf32>
    %95 = vector.shape_cast %94 : vector<8xf32> to vector<8x1xf32>
    %96 = tpu.reciprocal %95 {approx = true} : vector<8x1xf32> -> vector<8x1xf32>
    %97 = vector.broadcast %96 : vector<8x1xf32> to vector<8x128xf32>
    %98 = arith.mulf %93, %97 : vector<8x128xf32>
    %99 = arith.subf %98, %3 : vector<8x128xf32>
    %100 = arith.truncf %99 : vector<8x128xf32> to vector<8x128xbf16>
    %cst_39 = arith.constant dense<0.000000e+00> : vector<8x768xf32>
    %101 = tpu.matmul %100, %5, %cst_39 {dimension_numbers = #tpu.dot_dimension_numbers<[1], [0], [0], [1], [0, 0, 1, 1], [], []>} : vector<8x128xbf16>, vector<128x768xbf16>, vector<8x768xf32> -> vector<8x768xf32>
    %cst_40 = arith.constant 0.000000e+00 : f32
    %102 = vector.broadcast %cst_40 : f32 to vector<8x768xf32>
    %103 = arith.cmpf oge, %101, %102 : vector<8x768xf32>
    %cst_41 = arith.constant 0.000000e+00 : f32
    %cst_42 = arith.constant 0.00784313772 : f32
    %104 = arith.subf %cst_41, %cst_42 : f32
    %cst_43 = arith.constant 0.00784313772 : f32
    %105 = vector.broadcast %cst_43 : f32 to vector<8x768xf32>
    %106 = vector.broadcast %104 : f32 to vector<8x768xf32>
    %107 = arith.select %103, %105, %106 : vector<8x768xi1>, vector<8x768xf32>
    %108 = arith.addf %84, %107 : vector<8x768xf32>
    %109 = arith.maximumf %108, %1 : vector<8x768xf32>
    %110 = arith.minimumf %109, %2 : vector<8x768xf32>
    %111 = arith.truncf %110 : vector<8x768xf32> to vector<8x768xbf16>
    %cst_44 = arith.constant dense<0.000000e+00> : vector<8x128xf32>
    %112 = tpu.matmul %111, %4, %cst_44 {dimension_numbers = #tpu.dot_dimension_numbers<[1], [0], [0], [1], [0, 0, 1, 1], [], []>} : vector<8x768xbf16>, vector<768x128xbf16>, vector<8x128xf32> -> vector<8x128xf32>
    %113 = vector.broadcast %6 : vector<1x128xf32> to vector<8x128xf32>
    %114 = arith.addf %112, %113 : vector<8x128xf32>
    %cst_45 = arith.constant dense<0xFF800000> : vector<8xf32>
    %115 = vector.multi_reduction <maximumf>, %114, %cst_45 [1] : vector<8x128xf32> to vector<8xf32>
    %116 = vector.shape_cast %115 : vector<8xf32> to vector<8x1xf32>
    %117 = vector.broadcast %116 : vector<8x1xf32> to vector<8x128xf32>
    %118 = arith.subf %114, %117 : vector<8x128xf32>
    %119 = math.exp %118 : vector<8x128xf32>
    %cst_46 = arith.constant dense<0.000000e+00> : vector<8xf32>
    %120 = vector.multi_reduction <add>, %119, %cst_46 [1] : vector<8x128xf32> to vector<8xf32>
    %121 = vector.shape_cast %120 : vector<8xf32> to vector<8x1xf32>
    %122 = tpu.reciprocal %121 {approx = true} : vector<8x1xf32> -> vector<8x1xf32>
    %123 = vector.broadcast %122 : vector<8x1xf32> to vector<8x128xf32>
    %124 = arith.mulf %119, %123 : vector<8x128xf32>
    %125 = arith.subf %124, %3 : vector<8x128xf32>
    %126 = arith.truncf %125 : vector<8x128xf32> to vector<8x128xbf16>
    %cst_47 = arith.constant dense<0.000000e+00> : vector<8x768xf32>
    %127 = tpu.matmul %126, %5, %cst_47 {dimension_numbers = #tpu.dot_dimension_numbers<[1], [0], [0], [1], [0, 0, 1, 1], [], []>} : vector<8x128xbf16>, vector<128x768xbf16>, vector<8x768xf32> -> vector<8x768xf32>
    %cst_48 = arith.constant 0.000000e+00 : f32
    %128 = vector.broadcast %cst_48 : f32 to vector<8x768xf32>
    %129 = arith.cmpf oge, %127, %128 : vector<8x768xf32>
    %cst_49 = arith.constant 0.000000e+00 : f32
    %cst_50 = arith.constant 0.00784313772 : f32
    %130 = arith.subf %cst_49, %cst_50 : f32
    %cst_51 = arith.constant 0.00784313772 : f32
    %131 = vector.broadcast %cst_51 : f32 to vector<8x768xf32>
    %132 = vector.broadcast %130 : f32 to vector<8x768xf32>
    %133 = arith.select %129, %131, %132 : vector<8x768xi1>, vector<8x768xf32>
    %134 = arith.addf %110, %133 : vector<8x768xf32>
    %135 = arith.maximumf %134, %1 : vector<8x768xf32>
    %136 = arith.minimumf %135, %2 : vector<8x768xf32>
    %137 = arith.truncf %136 : vector<8x768xf32> to vector<8x768xbf16>
    %cst_52 = arith.constant dense<0.000000e+00> : vector<8x128xf32>
    %138 = tpu.matmul %137, %4, %cst_52 {dimension_numbers = #tpu.dot_dimension_numbers<[1], [0], [0], [1], [0, 0, 1, 1], [], []>} : vector<8x768xbf16>, vector<768x128xbf16>, vector<8x128xf32> -> vector<8x128xf32>
    %139 = vector.broadcast %6 : vector<1x128xf32> to vector<8x128xf32>
    %140 = arith.addf %138, %139 : vector<8x128xf32>
    %c0_53 = arith.constant 0 : index
    %c0_54 = arith.constant 0 : index
    %141 = vector.load %arg8[%c0_53, %c0_54] : memref<8x128xf32, #tpu.memory_space<vmem>>, vector<8x128xf32>
    tpu.vector_store %arg8[%c0_53, %c0_54], %140 {strides = array<i32>} : memref<8x128xf32, #tpu.memory_space<vmem>>, vector<8x128xf32>,
    %c0_55 = arith.constant 0 : index
    %c0_56 = arith.constant 0 : index
    %142 = vector.load %arg9[%c0_55, %c0_56] : memref<8x768xf32, #tpu.memory_space<vmem>>, vector<8x768xf32>
    tpu.vector_store %arg9[%c0_55, %c0_56], %136 {strides = array<i32>} : memref<8x768xf32, #tpu.memory_space<vmem>>, vector<8x768xf32>,
    return
  }
  func.func @transform_0(%arg0: i32) -> (i32, i32) {
    %c0_i32 = arith.constant 0 : i32
    %c0_i32_0 = arith.constant 0 : i32
    return %arg0, %c0_i32 : i32, i32
  }
  func.func @transform_1(%arg0: i32) -> (i32, i32) {
    %c0_i32 = arith.constant 0 : i32
    %c0_i32_0 = arith.constant 0 : i32
    return %arg0, %c0_i32 : i32, i32
  }
  func.func @transform_2(%arg0: i32) -> (i32, i32) {
    %c0_i32 = arith.constant 0 : i32
    %c0_i32_0 = arith.constant 0 : i32
    return %arg0, %c0_i32 : i32, i32
  }
  func.func @transform_3(%arg0: i32) -> (i32, i32) {
    %c0_i32 = arith.constant 0 : i32
    %c0_i32_0 = arith.constant 0 : i32
    return %arg0, %c0_i32 : i32, i32
  }
  func.func @transform_4(%arg0: i32) -> (i32, i32) {
    %c0_i32 = arith.constant 0 : i32
    %c0_i32_0 = arith.constant 0 : i32
    %c0_i32_1 = arith.constant 0 : i32
    return %c0_i32, %c0_i32_0 : i32, i32
  }
  func.func @transform_5(%arg0: i32) -> (i32, i32) {
    %c0_i32 = arith.constant 0 : i32
    %c0_i32_0 = arith.constant 0 : i32
    %c0_i32_1 = arith.constant 0 : i32
    return %c0_i32, %c0_i32_0 : i32, i32
  }
  func.func @transform_6(%arg0: i32) -> (i32, i32) {
    %c0_i32 = arith.constant 0 : i32
    %c0_i32_0 = arith.constant 0 : i32
    %c0_i32_1 = arith.constant 0 : i32
    return %c0_i32, %c0_i32_0 : i32, i32
  }
  func.func @transform_7(%arg0: i32) -> (i32, i32) {
    %c0_i32 = arith.constant 0 : i32
    %c0_i32_0 = arith.constant 0 : i32
    return %arg0, %c0_i32 : i32, i32
  }
  func.func @transform_8(%arg0: i32) -> (i32, i32) {
    %c0_i32 = arith.constant 0 : i32
    %c0_i32_0 = arith.constant 0 : i32
    return %arg0, %c0_i32 : i32, i32
  }
}

</mosaic_0001>

<llo_original>
// kernel: tpu_custom_call.1
$region0: #{tpu_custom_call.1}
  #allocation0 [shape = 'u32[]', space=smem, size = 0x4, offset = 0x4, fixed_abs, tag = 'smem constant byte address 0x4 - core index']
  #allocation1 [shape = 'u32[144,128]{1,0:T(1,128)}', space=vmem, size = 0x12000, scoped, tag = 'internal scratch']
  %s0 = inlined_call_operand.hbm [shape: f32[8,768], index: 0, kind: input, shape index: {}, may-alias: {0,8}]
  %s1 = inlined_call_operand.vmem [shape: f32[8,768], index: 1, kind: input, shape index: {}]
  %s2 = inlined_call_operand.vmem [shape: f32[8,768], index: 2, kind: input, shape index: {}]
  %s3 = inlined_call_operand.hbm [shape: f32[8,128], index: 3, kind: input, shape index: {}]
  %s4 = inlined_call_operand.hbm [shape: bf16[768,128], index: 4, kind: input, shape index: {}]
  %s5 = inlined_call_operand.hbm [shape: bf16[128,768], index: 5, kind: input, shape index: {}]
  %s6 = inlined_call_operand.vmem [shape: f32[1,128], index: 6, kind: input, shape index: {}]
  %s7 = inlined_call_operand.hbm [shape: f32[8,128], index: 7, kind: output, shape index: {0}]
  %s8 = inlined_call_operand.hbm [shape: f32[8,768], index: 8, kind: output, shape index: {1}, may-alias: {0,8}]
  %9 = xla_tuple %s7, %s8
  %s10 = sld [smem:[#allocation0]]
  $region62: #{tpu_custom_call.1} parent=0
    _
  %s12 = ssub.s32 1, %s10
  %s13 = scalar_select 0, %s12, %s10
  $region1: #{tpu_custom_call.1} parent=0
    #allocation2 [shape = 'u8[24576]{0}', space=vmem, size = 0x6000, scoped, tag = 'input window, operand 0, single buffered']
    #allocation3 [shape = 's32[1]{0}', space=sflag, size = 0x4, scoped, tag = 'scoped memory for tpu_custom_call.1']
    #allocation4 [shape = 's32[1]{0}', space=sflag, size = 0x4, scoped, tag = 'scoped memory for tpu_custom_call.1']
    #allocation5 [shape = 'u8[4096]{0}', space=vmem, size = 0x1000, scoped, tag = 'input window, operand 3, single buffered']
    #allocation6 [shape = 's32[1]{0}', space=sflag, size = 0x4, scoped, tag = 'scoped memory for tpu_custom_call.1']
    #allocation7 [shape = 'u8[196608]{0}', space=vmem, size = 0x30000, scoped, tag = 'input window, operand 4, single buffered']
    #allocation8 [shape = 'u8[196608]{0}', space=vmem, size = 0x30000, scoped, tag = 'input window, operand 5, single buffered']
    #allocation9 [shape = 's32[1]{0}', space=sflag, size = 0x4, scoped, tag = 'scoped memory for tpu_custom_call.1']
    #allocation10 [shape = 'u8[4096]{0}', space=vmem, size = 0x1000, scoped, tag = 'output window, operand 0, single buffered']
    #allocation11 [shape = 'u8[24576]{0}', space=vmem, size = 0x6000, scoped, tag = 'output window, operand 1, single buffered']
    #allocation12 [shape = 's32[1]{0}', space=sflag, size = 0x4, scoped, tag = 'scoped memory for tpu_custom_call.1']
    %14 = vsyncpa [#allocation3], 0
    %15 = vsyncpa [#allocation6], 0
    %16 = vsyncpa [#allocation9], 0
    %17 = vsyncpa [#allocation4], 0
    %18 = vsyncpa [#allocation12], 0
    // Predicated region
    $region2: #{tpu_custom_call.1} parent=1 // pred_check
      _
    $region3: #{tpu_custom_call.1} parent=1 // pred_check_branch
      %20 = sbr.rel (0) target = $region5
    $region4: #{tpu_custom_call.1} parent=1 // pred_region
      %s22 = ssub.s32 768, 768
      %23 = vsyncadd [#allocation3], %s22
      %s25 = sshll.u32 [#allocation2], 4
      %s26 = int_to_ptr.vmem [resolvable:$true] %s25
      %28 = dma.hbm_to_vmem [thread:$0]  %s0, 768, %s26, [#allocation3]
    $region5: #{tpu_custom_call.1} parent=1 // pred_fallthru
      _
    // Predicated region
    $region6: #{tpu_custom_call.1} parent=1 // pred_check
      _
    $region7: #{tpu_custom_call.1} parent=1 // pred_check_branch
      %30 = sbr.rel (0) target = $region9
    $region8: #{tpu_custom_call.1} parent=1 // pred_region
      _
    $region9: #{tpu_custom_call.1} parent=1 // pred_fallthru
      _
    // Predicated region
    $region10: #{tpu_custom_call.1} parent=1 // pred_check
      _
    $region11: #{tpu_custom_call.1} parent=1 // pred_check_branch
      %32 = sbr.rel (0) target = $region13
    $region12: #{tpu_custom_call.1} parent=1 // pred_region
      _
    $region13: #{tpu_custom_call.1} parent=1 // pred_fallthru
      _
    // Predicated region
    $region14: #{tpu_custom_call.1} parent=1 // pred_check
      _
    $region15: #{tpu_custom_call.1} parent=1 // pred_check_branch
      %34 = sbr.rel (0) target = $region17
    $region16: #{tpu_custom_call.1} parent=1 // pred_region
      %s36 = ssub.s32 128, 128
      %37 = vsyncadd [#allocation6], %s36
      %s39 = sshll.u32 [#allocation5], 4
      %s40 = int_to_ptr.vmem [resolvable:$true] %s39
      %42 = dma.hbm_to_vmem [thread:$0]  %s3, 128, %s40, [#allocation6]
    $region17: #{tpu_custom_call.1} parent=1 // pred_fallthru
      _
    // Predicated region
    $region18: #{tpu_custom_call.1} parent=1 // pred_check
      _
    $region19: #{tpu_custom_call.1} parent=1 // pred_check_branch
      %44 = sbr.rel (0) target = $region21
    $region20: #{tpu_custom_call.1} parent=1 // pred_region
      %s46 = ssub.s32 6144, 6144
      %47 = vsyncadd [#allocation6], %s46
      %s48 = sshll.u32 [#allocation7], 4
      %s49 = int_to_ptr.vmem [resolvable:$true] %s48
      %54 = dma.hbm_to_vmem [thread:$0]  %s4, 6144, %s49, [#allocation6], 64, 64, 4
    $region21: #{tpu_custom_call.1} parent=1 // pred_fallthru
      _
    // Predicated region
    $region22: #{tpu_custom_call.1} parent=1 // pred_check
      _
    $region23: #{tpu_custom_call.1} parent=1 // pred_check_branch
      %56 = sbr.rel (0) target = $region25
    $region24: #{tpu_custom_call.1} parent=1 // pred_region
      %s58 = ssub.s32 6144, 6144
      %59 = vsyncadd [#allocation9], %s58
      %s60 = sshll.u32 [#allocation8], 4
      %s61 = int_to_ptr.vmem [resolvable:$true] %s60
      %66 = dma.hbm_to_vmem [thread:$0]  %s5, 6144, %s61, [#allocation9], 384, 384, 24
    $region25: #{tpu_custom_call.1} parent=1 // pred_fallthru
      _
    // Predicated region
    $region26: #{tpu_custom_call.1} parent=1 // pred_check
      _
    $region27: #{tpu_custom_call.1} parent=1 // pred_check_branch
      %68 = sbr.rel (0) target = $region29
    $region28: #{tpu_custom_call.1} parent=1 // pred_region
      _
    $region29: #{tpu_custom_call.1} parent=1 // pred_fallthru
      _
    // Predicated region
    $region30: #{tpu_custom_call.1} parent=1 // pred_check
      _
    $region31: #{tpu_custom_call.1} parent=1 // pred_check_branch
      %70 = sbr.rel (0) target = $region33
    $region32: #{tpu_custom_call.1} parent=1 // pred_region
      %71 = dma.done [#allocation3], 768
    $region33: #{tpu_custom_call.1} parent=1 // pred_fallthru
      _
    // Predicated region
    $region34: #{tpu_custom_call.1} parent=1 // pred_check
      _
    $region35: #{tpu_custom_call.1} parent=1 // pred_check_branch
      %73 = sbr.rel (0) target = $region37
    $region36: #{tpu_custom_call.1} parent=1 // pred_region
      %74 = dma.done [#allocation6], 128
    $region37: #{tpu_custom_call.1} parent=1 // pred_fallthru
      _
    // Predicated region
    $region38: #{tpu_custom_call.1} parent=1 // pred_check
      _
    $region39: #{tpu_custom_call.1} parent=1 // pred_check_branch
      %76 = sbr.rel (0) target = $region41
    $region40: #{tpu_custom_call.1} parent=1 // pred_region
      %77 = dma.done [#allocation6], 6144
    $region41: #{tpu_custom_call.1} parent=1 // pred_fallthru
      _
    // Predicated region
    $region42: #{tpu_custom_call.1} parent=1 // pred_check
      _
    $region43: #{tpu_custom_call.1} parent=1 // pred_check_branch
      %79 = sbr.rel (0) target = $region45
    $region44: #{tpu_custom_call.1} parent=1 // pred_region
      %80 = dma.done [#allocation9], 6144
    $region45: #{tpu_custom_call.1} parent=1 // pred_fallthru
      _
    %v82 = vld [vmem:[#allocation2] sm:$0xff]
    %v83 = vld [vmem:[#allocation2 + $0x8] sm:$0xff]
    %v84 = vld [vmem:[#allocation2 + $0x10] sm:$0xff]
    %v85 = vld [vmem:[#allocation2 + $0x18] sm:$0xff]
    %v86 = vld [vmem:[#allocation2 + $0x20] sm:$0xff]
    %v87 = vld [vmem:[#allocation2 + $0x28] sm:$0xff]
    %v88 = vld [vmem:[%s1] sm:$0xff]
    %v89 = vld [vmem:[%s1 + $0x8] sm:$0xff]
    %v90 = vld [vmem:[%s1 + $0x10] sm:$0xff]
    %v91 = vld [vmem:[%s1 + $0x18] sm:$0xff]
    %v92 = vld [vmem:[%s1 + $0x20] sm:$0xff]
    %v93 = vld [vmem:[%s1 + $0x28] sm:$0xff]
    %v94 = vld [vmem:[%s2] sm:$0xff]
    %v95 = vld [vmem:[%s2 + $0x8] sm:$0xff]
    %v96 = vld [vmem:[%s2 + $0x10] sm:$0xff]
    %v97 = vld [vmem:[%s2 + $0x18] sm:$0xff]
    %v98 = vld [vmem:[%s2 + $0x20] sm:$0xff]
    %v99 = vld [vmem:[%s2 + $0x28] sm:$0xff]
    %v100 = vld [vmem:[#allocation5] sm:$0xff]
    %v101 = vld [vmem:[#allocation7] sm:$0xf]
    %v102 = vld [vmem:[#allocation7 + $0x4] sm:$0xf]
    %v103 = vld [vmem:[#allocation7 + $0x8] sm:$0xf]
    %v104 = vld [vmem:[#allocation7 + $0xc] sm:$0xf]
    %v105 = vld [vmem:[#allocation7 + $0x10] sm:$0xf]
    %v106 = vld [vmem:[#allocation7 + $0x14] sm:$0xf]
    %v107 = vld [vmem:[#allocation7 + $0x18] sm:$0xf]
    %v108 = vld [vmem:[#allocation7 + $0x1c] sm:$0xf]
    %v109 = vld [vmem:[#allocation7 + $0x20] sm:$0xf]
    %v110 = vld [vmem:[#allocation7 + $0x24] sm:$0xf]
    %v111 = vld [vmem:[#allocation7 + $0x28] sm:$0xf]
    %v112 = vld [vmem:[#allocation7 + $0x2c] sm:$0xf]
    %v113 = vld [vmem:[#allocation7 + $0x30] sm:$0xf]
    %v114 = vld [vmem:[#allocation7 + $0x34] sm:$0xf]
    %v115 = vld [vmem:[#allocation7 + $0x38] sm:$0xf]
    %v116 = vld [vmem:[#allocation7 + $0x3c] sm:$0xf]
    %v117 = vld [vmem:[#allocation7 + $0x40] sm:$0xf]
    %v118 = vld [vmem:[#allocation7 + $0x44] sm:$0xf]
    %v119 = vld [vmem:[#allocation7 + $0x48] sm:$0xf]
    %v120 = vld [vmem:[#allocation7 + $0x4c] sm:$0xf]
    %v121 = vld [vmem:[#allocation7 + $0x50] sm:$0xf]
    %v122 = vld [vmem:[#allocation7 + $0x54] sm:$0xf]
    %v123 = vld [vmem:[#allocation7 + $0x58] sm:$0xf]
    %v124 = vld [vmem:[#allocation7 + $0x5c] sm:$0xf]
    %v125 = vld [vmem:[#allocation7 + $0x60] sm:$0xf]
    %v126 = vld [vmem:[#allocation7 + $0x64] sm:$0xf]
    %v127 = vld [vmem:[#allocation7 + $0x68] sm:$0xf]
    %v128 = vld [vmem:[#allocation7 + $0x6c] sm:$0xf]
    %v129 = vld [vmem:[#allocation7 + $0x70] sm:$0xf]
    %v130 = vld [vmem:[#allocation7 + $0x74] sm:$0xf]
    %v131 = vld [vmem:[#allocation7 + $0x78] sm:$0xf]
    %v132 = vld [vmem:[#allocation7 + $0x7c] sm:$0xf]
    %v133 = vld [vmem:[#allocation7 + $0x80] sm:$0xf]
    %v134 = vld [vmem:[#allocation7 + $0x84] sm:$0xf]
    %v135 = vld [vmem:[#allocation7 + $0x88] sm:$0xf]
    %v136 = vld [vmem:[#allocation7 + $0x8c] sm:$0xf]
    %v137 = vld [vmem:[#allocation7 + $0x90] sm:$0xf]
    %v138 = vld [vmem:[#allocation7 + $0x94] sm:$0xf]
    %v139 = vld [vmem:[#allocation7 + $0x98] sm:$0xf]
    %v140 = vld [vmem:[#allocation7 + $0x9c] sm:$0xf]
    %v141 = vld [vmem:[#allocation7 + $0xa0] sm:$0xf]
    %v142 = vld [vmem:[#allocation7 + $0xa4] sm:$0xf]
    %v143 = vld [vmem:[#allocation7 + $0xa8] sm:$0xf]
    %v144 = vld [vmem:[#allocation7 + $0xac] sm:$0xf]
    %v145 = vld [vmem:[#allocation7 + $0xb0] sm:$0xf]
    %v146 = vld [vmem:[#allocation7 + $0xb4] sm:$0xf]
    %v147 = vld [vmem:[#allocation7 + $0xb8] sm:$0xf]
    %v148 = vld [vmem:[#allocation7 + $0xbc] sm:$0xf]
    %v149 = vld [vmem:[#allocation7 + $0xc0] sm:$0xf]
    %v150 = vld [vmem:[#allocation7 + $0xc4] sm:$0xf]
    %v151 = vld [vmem:[#allocation7 + $0xc8] sm:$0xf]
    %v152 = vld [vmem:[#allocation7 + $0xcc] sm:$0xf]
    %v153 = vld [vmem:[#allocation7 + $0xd0] sm:$0xf]
    %v154 = vld [vmem:[#allocation7 + $0xd4] sm:$0xf]
    %v155 = vld [vmem:[#allocation7 + $0xd8] sm:$0xf]
    %v156 = vld [vmem:[#allocation7 + $0xdc] sm:$0xf]
    %v157 = vld [vmem:[#allocation7 + $0xe0] sm:$0xf]
    %v158 = vld [vmem:[#allocation7 + $0xe4] sm:$0xf]
    %v159 = vld [vmem:[#allocation7 + $0xe8] sm:$0xf]
    %v160 = vld [vmem:[#allocation7 + $0xec] sm:$0xf]
    %v161 = vld [vmem:[#allocation7 + $0xf0] sm:$0xf]
    %v162 = vld [vmem:[#allocation7 + $0xf4] sm:$0xf]
    %v163 = vld [vmem:[#allocation7 + $0xf8] sm:$0xf]
    %v164 = vld [vmem:[#allocation7 + $0xfc] sm:$0xf]
    %v165 = vld [vmem:[#allocation7 + $0x100] sm:$0xf]
    %v166 = vld [vmem:[#allocation7 + $0x104] sm:$0xf]
    %v167 = vld [vmem:[#allocation7 + $0x108] sm:$0xf]
    %v168 = vld [vmem:[#allocation7 + $0x10c] sm:$0xf]
    %v169 = vld [vmem:[#allocation7 + $0x110] sm:$0xf]
    %v170 = vld [vmem:[#allocation7 + $0x114] sm:$0xf]
    %v171 = vld [vmem:[#allocation7 + $0x118] sm:$0xf]
    %v172 = vld [vmem:[#allocation7 + $0x11c] sm:$0xf]
    %v173 = vld [vmem:[#allocation7 + $0x120] sm:$0xf]
    %v174 = vld [vmem:[#allocation7 + $0x124] sm:$0xf]
    %v175 = vld [vmem:[#allocation7 + $0x128] sm:$0xf]
    %v176 = vld [vmem:[#allocation7 + $0x12c] sm:$0xf]
    %v177 = vld [vmem:[#allocation7 + $0x130] sm:$0xf]
    %v178 = vld [vmem:[#allocation7 + $0x134] sm:$0xf]
    %v179 = vld [vmem:[#allocation7 + $0x138] sm:$0xf]
    %v180 = vld [vmem:[#allocation7 + $0x13c] sm:$0xf]
    %v181 = vld [vmem:[#allocation7 + $0x140] sm:$0xf]
    %v182 = vld [vmem:[#allocation7 + $0x144] sm:$0xf]
    %v183 = vld [vmem:[#allocation7 + $0x148] sm:$0xf]
    %v184 = vld [vmem:[#allocation7 + $0x14c] sm:$0xf]
    %v185 = vld [vmem:[#allocation7 + $0x150] sm:$0xf]
    %v186 = vld [vmem:[#allocation7 + $0x154] sm:$0xf]
    %v187 = vld [vmem:[#allocation7 + $0x158] sm:$0xf]
    %v188 = vld [vmem:[#allocation7 + $0x15c] sm:$0xf]
    %v189 = vld [vmem:[#allocation7 + $0x160] sm:$0xf]
    %v190 = vld [vmem:[#allocation7 + $0x164] sm:$0xf]
    %v191 = vld [vmem:[#allocation7 + $0x168] sm:$0xf]
    %v192 = vld [vmem:[#allocation7 + $0x16c] sm:$0xf]
    %v193 = vld [vmem:[#allocation7 + $0x170] sm:$0xf]
    %v194 = vld [vmem:[#allocation7 + $0x174] sm:$0xf]
    %v195 = vld [vmem:[#allocation7 + $0x178] sm:$0xf]
    %v196 = vld [vmem:[#allocation7 + $0x17c] sm:$0xf]
    %v197 = vld [vmem:[#allocation8] sm:$0xff]
    %v198 = vld [vmem:[#allocation8 + $0x8] sm:$0xff]
    %v199 = vld [vmem:[#allocation8 + $0x10] sm:$0xff]
    %v200 = vld [vmem:[#allocation8 + $0x18] sm:$0xff]
    %v201 = vld [vmem:[#allocation8 + $0x20] sm:$0xff]
    %v202 = vld [vmem:[#allocation8 + $0x28] sm:$0xff]
    %v203 = vld [vmem:[#allocation8 + $0x30] sm:$0xff]
    %v204 = vld [vmem:[#allocation8 + $0x38] sm:$0xff]
    %v205 = vld [vmem:[#allocation8 + $0x40] sm:$0xff]
    %v206 = vld [vmem:[#allocation8 + $0x48] sm:$0xff]
    %v207 = vld [vmem:[#allocation8 + $0x50] sm:$0xff]
    %v208 = vld [vmem:[#allocation8 + $0x58] sm:$0xff]
    %v209 = vld [vmem:[#allocation8 + $0x60] sm:$0xff]
    %v210 = vld [vmem:[#allocation8 + $0x68] sm:$0xff]
    %v211 = vld [vmem:[#allocation8 + $0x70] sm:$0xff]
    %v212 = vld [vmem:[#allocation8 + $0x78] sm:$0xff]
    %v213 = vld [vmem:[#allocation8 + $0x80] sm:$0xff]
    %v214 = vld [vmem:[#allocation8 + $0x88] sm:$0xff]
    %v215 = vld [vmem:[#allocation8 + $0x90] sm:$0xff]
    %v216 = vld [vmem:[#allocation8 + $0x98] sm:$0xff]
    %v217 = vld [vmem:[#allocation8 + $0xa0] sm:$0xff]
    %v218 = vld [vmem:[#allocation8 + $0xa8] sm:$0xff]
    %v219 = vld [vmem:[#allocation8 + $0xb0] sm:$0xff]
    %v220 = vld [vmem:[#allocation8 + $0xb8] sm:$0xff]
    %v221 = vld [vmem:[#allocation8 + $0xc0] sm:$0xff]
    %v222 = vld [vmem:[#allocation8 + $0xc8] sm:$0xff]
    %v223 = vld [vmem:[#allocation8 + $0xd0] sm:$0xff]
    %v224 = vld [vmem:[#allocation8 + $0xd8] sm:$0xff]
    %v225 = vld [vmem:[#allocation8 + $0xe0] sm:$0xff]
    %v226 = vld [vmem:[#allocation8 + $0xe8] sm:$0xff]
    %v227 = vld [vmem:[#allocation8 + $0xf0] sm:$0xff]
    %v228 = vld [vmem:[#allocation8 + $0xf8] sm:$0xff]
    %v229 = vld [vmem:[#allocation8 + $0x100] sm:$0xff]
    %v230 = vld [vmem:[#allocation8 + $0x108] sm:$0xff]
    %v231 = vld [vmem:[#allocation8 + $0x110] sm:$0xff]
    %v232 = vld [vmem:[#allocation8 + $0x118] sm:$0xff]
    %v233 = vld [vmem:[#allocation8 + $0x120] sm:$0xff]
    %v234 = vld [vmem:[#allocation8 + $0x128] sm:$0xff]
    %v235 = vld [vmem:[#allocation8 + $0x130] sm:$0xff]
    %v236 = vld [vmem:[#allocation8 + $0x138] sm:$0xff]
    %v237 = vld [vmem:[#allocation8 + $0x140] sm:$0xff]
    %v238 = vld [vmem:[#allocation8 + $0x148] sm:$0xff]
    %v239 = vld [vmem:[#allocation8 + $0x150] sm:$0xff]
    %v240 = vld [vmem:[#allocation8 + $0x158] sm:$0xff]
    %v241 = vld [vmem:[#allocation8 + $0x160] sm:$0xff]
    %v242 = vld [vmem:[#allocation8 + $0x168] sm:$0xff]
    %v243 = vld [vmem:[#allocation8 + $0x170] sm:$0xff]
    %v244 = vld [vmem:[#allocation8 + $0x178] sm:$0xff]
    %v245 = vld [vmem:[%s6] sm:$0x1]
    %v246 = vpack.c.bf16 %v82, %v82
    %v247 = vpack.c.bf16 %v83, %v83
    %v248 = vpack.c.bf16 %v84, %v84
    %v249 = vpack.c.bf16 %v85, %v85
    %v250 = vpack.c.bf16 %v86, %v86
    %v251 = vpack.c.bf16 %v87, %v87
    %v253 = vlaneseq
    %v254 = vshrl.u32 %v253, 7
    %v255 = vsub.s32 0, %v254
    %v256 = vrot.slane %v245, %v255
    %v354 = vunpack.c.l.b16 %v101
    %v355 = vunpack.c.l.b16 %v102
    %v356 = vunpack.c.l.b16 %v103
    %v357 = vunpack.c.l.b16 %v104
    %v358 = vunpack.c.l.b16 %v105
    %v359 = vunpack.c.l.b16 %v106
    %v360 = vunpack.c.l.b16 %v107
    %v361 = vunpack.c.l.b16 %v108
    %v362 = vunpack.c.l.b16 %v109
    %v363 = vunpack.c.l.b16 %v110
    %v364 = vunpack.c.l.b16 %v111
    %v365 = vunpack.c.l.b16 %v112
    %v366 = vunpack.c.l.b16 %v113
    %v367 = vunpack.c.l.b16 %v114
    %v368 = vunpack.c.l.b16 %v115
    %v369 = vunpack.c.l.b16 %v116
    %v370 = vunpack.c.l.b16 %v117
    %v371 = vunpack.c.l.b16 %v118
    %v372 = vunpack.c.l.b16 %v119
    %v373 = vunpack.c.l.b16 %v120
    %v374 = vunpack.c.l.b16 %v121
    %v375 = vunpack.c.l.b16 %v122
    %v376 = vunpack.c.l.b16 %v123
    %v377 = vunpack.c.l.b16 %v124
    %v378 = vunpack.c.l.b16 %v125
    %v379 = vunpack.c.l.b16 %v126
    %v380 = vunpack.c.l.b16 %v127
    %v381 = vunpack.c.l.b16 %v128
    %v382 = vunpack.c.l.b16 %v129
    %v383 = vunpack.c.l.b16 %v130
    %v384 = vunpack.c.l.b16 %v131
    %v385 = vunpack.c.l.b16 %v132
    %v386 = vunpack.c.l.b16 %v133
    %v387 = vunpack.c.l.b16 %v134
    %v388 = vunpack.c.l.b16 %v135
    %v389 = vunpack.c.l.b16 %v136
    %v390 = vunpack.c.l.b16 %v137
    %v391 = vunpack.c.l.b16 %v138
    %v392 = vunpack.c.l.b16 %v139
    %v393 = vunpack.c.l.b16 %v140
    %v394 = vunpack.c.l.b16 %v141
    %v395 = vunpack.c.l.b16 %v142
    %v396 = vunpack.c.l.b16 %v143
    %v397 = vunpack.c.l.b16 %v144
    %v398 = vunpack.c.l.b16 %v145
    %v399 = vunpack.c.l.b16 %v146
    %v400 = vunpack.c.l.b16 %v147
    %v401 = vunpack.c.l.b16 %v148
    %v402 = vunpack.c.l.b16 %v149
    %v403 = vunpack.c.l.b16 %v150
    %v404 = vunpack.c.l.b16 %v151
    %v405 = vunpack.c.l.b16 %v152
    %v406 = vunpack.c.l.b16 %v153
    %v407 = vunpack.c.l.b16 %v154
    %v408 = vunpack.c.l.b16 %v155
    %v409 = vunpack.c.l.b16 %v156
    %v410 = vunpack.c.l.b16 %v157
    %v411 = vunpack.c.l.b16 %v158
    %v412 = vunpack.c.l.b16 %v159
    %v413 = vunpack.c.l.b16 %v160
    %v414 = vunpack.c.l.b16 %v161
    %v415 = vunpack.c.l.b16 %v162
    %v416 = vunpack.c.l.b16 %v163
    %v417 = vunpack.c.l.b16 %v164
    %v418 = vunpack.c.l.b16 %v165
    %v419 = vunpack.c.l.b16 %v166
    %v420 = vunpack.c.l.b16 %v167
    %v421 = vunpack.c.l.b16 %v168
    %v422 = vunpack.c.l.b16 %v169
    %v423 = vunpack.c.l.b16 %v170
    %v424 = vunpack.c.l.b16 %v171
    %v425 = vunpack.c.l.b16 %v172
    %v426 = vunpack.c.l.b16 %v173
    %v427 = vunpack.c.l.b16 %v174
    %v428 = vunpack.c.l.b16 %v175
    %v429 = vunpack.c.l.b16 %v176
    %v430 = vunpack.c.l.b16 %v177
    %v431 = vunpack.c.l.b16 %v178
    %v432 = vunpack.c.l.b16 %v179
    %v433 = vunpack.c.l.b16 %v180
    %v434 = vunpack.c.l.b16 %v181
    %v435 = vunpack.c.l.b16 %v182
    %v436 = vunpack.c.l.b16 %v183
    %v437 = vunpack.c.l.b16 %v184
    %v438 = vunpack.c.l.b16 %v185
    %v439 = vunpack.c.l.b16 %v186
    %v440 = vunpack.c.l.b16 %v187
    %v441 = vunpack.c.l.b16 %v188
    %v442 = vunpack.c.l.b16 %v189
    %v443 = vunpack.c.l.b16 %v190
    %v444 = vunpack.c.l.b16 %v191
    %v445 = vunpack.c.l.b16 %v192
    %v446 = vunpack.c.l.b16 %v193
    %v447 = vunpack.c.l.b16 %v194
    %v448 = vunpack.c.l.b16 %v195
    %v449 = vunpack.c.l.b16 %v196
    %v450 = vpack.c.b16 %v355, %v354
    %v451 = vpack.c.b16 %v357, %v356
    %v452 = vpack.c.b16 %v359, %v358
    %v453 = vpack.c.b16 %v361, %v360
    %v454 = vpack.c.b16 %v363, %v362
    %v455 = vpack.c.b16 %v365, %v364
    %v456 = vpack.c.b16 %v367, %v366
    %v457 = vpack.c.b16 %v369, %v368
    %v458 = vpack.c.b16 %v371, %v370
    %v459 = vpack.c.b16 %v373, %v372
    %v460 = vpack.c.b16 %v375, %v374
    %v461 = vpack.c.b16 %v377, %v376
    %v462 = vpack.c.b16 %v379, %v378
    %v463 = vpack.c.b16 %v381, %v380
    %v464 = vpack.c.b16 %v383, %v382
    %v465 = vpack.c.b16 %v385, %v384
    %v466 = vpack.c.b16 %v387, %v386
    %v467 = vpack.c.b16 %v389, %v388
    %v468 = vpack.c.b16 %v391, %v390
    %v469 = vpack.c.b16 %v393, %v392
    %v470 = vpack.c.b16 %v395, %v394
    %v471 = vpack.c.b16 %v397, %v396
    %v472 = vpack.c.b16 %v399, %v398
    %v473 = vpack.c.b16 %v401, %v400
    %v474 = vpack.c.b16 %v403, %v402
    %v475 = vpack.c.b16 %v405, %v404
    %v476 = vpack.c.b16 %v407, %v406
    %v477 = vpack.c.b16 %v409, %v408
    %v478 = vpack.c.b16 %v411, %v410
    %v479 = vpack.c.b16 %v413, %v412
    %v480 = vpack.c.b16 %v415, %v414
    %v481 = vpack.c.b16 %v417, %v416
    %v482 = vpack.c.b16 %v419, %v418
    %v483 = vpack.c.b16 %v421, %v420
    %v484 = vpack.c.b16 %v423, %v422
    %v485 = vpack.c.b16 %v425, %v424
    %v486 = vpack.c.b16 %v427, %v426
    %v487 = vpack.c.b16 %v429, %v428
    %v488 = vpack.c.b16 %v431, %v430
    %v489 = vpack.c.b16 %v433, %v432
    %v490 = vpack.c.b16 %v435, %v434
    %v491 = vpack.c.b16 %v437, %v436
    %v492 = vpack.c.b16 %v439, %v438
    %v493 = vpack.c.b16 %v441, %v440
    %v494 = vpack.c.b16 %v443, %v442
    %v495 = vpack.c.b16 %v445, %v444
    %v496 = vpack.c.b16 %v447, %v446
    %v497 = vpack.c.b16 %v449, %v448
    %546 = vmatprep.subr.bf16.mxu0 0
    %547 = vmatpush1.bf16.msra.mxu0 %v457
    %548 = vmatprep.subr.bf16.mxu0 0
    %549 = vmatpush1.bf16.msra.mxu0 %v456
    %550 = vmatprep.subr.bf16.mxu0 0
    %551 = vmatpush1.bf16.msra.mxu0 %v455
    %552 = vmatprep.subr.bf16.mxu0 0
    %553 = vmatpush1.bf16.msra.mxu0 %v454
    %554 = vmatprep.subr.bf16.mxu0 0
    %555 = vmatpush1.bf16.msra.mxu0 %v453
    %556 = vmatprep.subr.bf16.mxu0 0
    %557 = vmatpush1.bf16.msra.mxu0 %v452
    %558 = vmatprep.subr.bf16.mxu0 0
    %559 = vmatpush1.bf16.msra.mxu0 %v451
    %560 = vmatprep.subr.bf16.mxu0 0
    %561 = vmatpush1.bf16.msra.mxu0 %v450
    %562 = vmatprep.subr.bf16.mxu0 0
    %563 = vmatpush2.bf16.msra.mxu0 %v465
    %564 = vmatprep.subr.bf16.mxu0 0
    %565 = vmatpush2.bf16.msra.mxu0 %v464
    %566 = vmatprep.subr.bf16.mxu0 0
    %567 = vmatpush2.bf16.msra.mxu0 %v463
    %568 = vmatprep.subr.bf16.mxu0 0
    %569 = vmatpush2.bf16.msra.mxu0 %v462
    %570 = vmatprep.subr.bf16.mxu0 0
    %571 = vmatpush2.bf16.msra.mxu0 %v461
    %572 = vmatprep.subr.bf16.mxu0 0
    %573 = vmatpush2.bf16.msra.mxu0 %v460
    %574 = vmatprep.subr.bf16.mxu0 0
    %575 = vmatpush2.bf16.msra.mxu0 %v459
    %576 = vmatprep.subr.bf16.mxu0 0
    %577 = vmatpush2.bf16.msra.mxu0 %v458
    %578 = vmatprep.mubr.bf16.mxu0 %v247
    %579 = vmatmul.mubr.bf16.gmra.mxu0 %v246
    %v580 = vpop.f32.mrf.mxu0
    %v581 = vadd.f32 %v256, %v580
    %v582 = vpop.f32.mrf.mxu0
    %v583 = vpop.f32.mrf.mxu0
    %v584 = vpop.f32.mrf.mxu0
    %585 = vdwg.mxu0
    %586 = vmatprep.subr.bf16.mxu0 0
    %587 = vmatpush1.bf16.msra.mxu0 %v473
    %588 = vmatprep.subr.bf16.mxu0 0
    %589 = vmatpush1.bf16.msra.mxu0 %v472
    %590 = vmatprep.subr.bf16.mxu0 0
    %591 = vmatpush1.bf16.msra.mxu0 %v471
    %592 = vmatprep.subr.bf16.mxu0 0
    %593 = vmatpush1.bf16.msra.mxu0 %v470
    %594 = vmatprep.subr.bf16.mxu0 0
    %595 = vmatpush1.bf16.msra.mxu0 %v469
    %596 = vmatprep.subr.bf16.mxu0 0
    %597 = vmatpush1.bf16.msra.mxu0 %v468
    %598 = vmatprep.subr.bf16.mxu0 0
    %599 = vmatpush1.bf16.msra.mxu0 %v467
    %600 = vmatprep.subr.bf16.mxu0 0
    %601 = vmatpush1.bf16.msra.mxu0 %v466
    %602 = vmatprep.subr.bf16.mxu0 0
    %603 = vmatpush2.bf16.msra.mxu0 %v481
    %604 = vmatprep.subr.bf16.mxu0 0
    %605 = vmatpush2.bf16.msra.mxu0 %v480
    %606 = vmatprep.subr.bf16.mxu0 0
    %607 = vmatpush2.bf16.msra.mxu0 %v479
    %608 = vmatprep.subr.bf16.mxu0 0
    %609 = vmatpush2.bf16.msra.mxu0 %v478
    %610 = vmatprep.subr.bf16.mxu0 0
    %611 = vmatpush2.bf16.msra.mxu0 %v477
    %612 = vmatprep.subr.bf16.mxu0 0
    %613 = vmatpush2.bf16.msra.mxu0 %v476
    %614 = vmatprep.subr.bf16.mxu0 0
    %615 = vmatpush2.bf16.msra.mxu0 %v475
    %616 = vmatprep.subr.bf16.mxu0 0
    %617 = vmatpush2.bf16.msra.mxu0 %v474
    %618 = vmatprep.mubr.bf16.mxu0 %v249
    %619 = vmatmul.mubr.bf16.gmra.mxu0 %v248
    %v620 = vpop.f32.mrf.mxu0
    %v621 = vadd.f32 %v581, %v620
    %v622 = vpop.f32.mrf.mxu0
    %v623 = vpop.f32.mrf.mxu0
    %v624 = vpop.f32.mrf.mxu0
    %625 = vdwg.mxu0
    %626 = vmatprep.subr.bf16.mxu0 0
    %627 = vmatpush1.bf16.msra.mxu0 %v489
    %628 = vmatprep.subr.bf16.mxu0 0
    %629 = vmatpush1.bf16.msra.mxu0 %v488
    %630 = vmatprep.subr.bf16.mxu0 0
    %631 = vmatpush1.bf16.msra.mxu0 %v487
    %632 = vmatprep.subr.bf16.mxu0 0
    %633 = vmatpush1.bf16.msra.mxu0 %v486
    %634 = vmatprep.subr.bf16.mxu0 0
    %635 = vmatpush1.bf16.msra.mxu0 %v485
    %636 = vmatprep.subr.bf16.mxu0 0
    %637 = vmatpush1.bf16.msra.mxu0 %v484
    %638 = vmatprep.subr.bf16.mxu0 0
    %639 = vmatpush1.bf16.msra.mxu0 %v483
    %640 = vmatprep.subr.bf16.mxu0 0
    %641 = vmatpush1.bf16.msra.mxu0 %v482
    %642 = vmatprep.subr.bf16.mxu0 0
    %643 = vmatpush2.bf16.msra.mxu0 %v497
    %644 = vmatprep.subr.bf16.mxu0 0
    %645 = vmatpush2.bf16.msra.mxu0 %v496
    %646 = vmatprep.subr.bf16.mxu0 0
    %647 = vmatpush2.bf16.msra.mxu0 %v495
    %648 = vmatprep.subr.bf16.mxu0 0
    %649 = vmatpush2.bf16.msra.mxu0 %v494
    %650 = vmatprep.subr.bf16.mxu0 0
    %651 = vmatpush2.bf16.msra.mxu0 %v493
    %652 = vmatprep.subr.bf16.mxu0 0
    %653 = vmatpush2.bf16.msra.mxu0 %v492
    %654 = vmatprep.subr.bf16.mxu0 0
    %655 = vmatpush2.bf16.msra.mxu0 %v491
    %656 = vmatprep.subr.bf16.mxu0 0
    %657 = vmatpush2.bf16.msra.mxu0 %v490
    %658 = vmatprep.mubr.bf16.mxu0 %v251
    %659 = vmatmul.mubr.bf16.gmra.mxu0 %v250
    %v660 = vpop.f32.mrf.mxu0
    %v661 = vadd.f32 %v621, %v660
    %v662 = vpop.f32.mrf.mxu0
    %v663 = vpop.f32.mrf.mxu0
    %v664 = vpop.f32.mrf.mxu0
    %665 = vdwg.mxu0
    %666 = vmax.xlane.f32.xlu0 %v661
    %v667 = vpop.xlane.xlu0 %666
    %v668 = vsub.f32 %v661, %v667
    %v669 = vmul.f32 %v668, 1.442695
    %v670 = vpow.pop %v669
    %671 = vadd.xlane.f32.xlu0 %v670
    %v672 = vpop.xlane.xlu0 %671
    %v673 = vrcp.pop %v672
    %v674 = vmul.f32 %v670, %v673
    %v675 = vsub.f32 %v674, %v100
    %v676 = vpack.c.bf16 %v675, %v675
    %v725 = vunpack.c.l.b16 %v197
    %v726 = vunpack.c.h.b16 %v197
    %v727 = vunpack.c.l.b16 %v198
    %v728 = vunpack.c.h.b16 %v198
    %v729 = vunpack.c.l.b16 %v199
    %v730 = vunpack.c.h.b16 %v199
    %v731 = vunpack.c.l.b16 %v200
    %v732 = vunpack.c.h.b16 %v200
    %v733 = vunpack.c.l.b16 %v201
    %v734 = vunpack.c.h.b16 %v201
    %v735 = vunpack.c.l.b16 %v202
    %v736 = vunpack.c.h.b16 %v202
    %v737 = vunpack.c.l.b16 %v203
    %v738 = vunpack.c.h.b16 %v203
    %v739 = vunpack.c.l.b16 %v204
    %v740 = vunpack.c.h.b16 %v204
    %v741 = vunpack.c.l.b16 %v205
    %v742 = vunpack.c.h.b16 %v205
    %v743 = vunpack.c.l.b16 %v206
    %v744 = vunpack.c.h.b16 %v206
    %v745 = vunpack.c.l.b16 %v207
    %v746 = vunpack.c.h.b16 %v207
    %v747 = vunpack.c.l.b16 %v208
    %v748 = vunpack.c.h.b16 %v208
    %v749 = vunpack.c.l.b16 %v209
    %v750 = vunpack.c.h.b16 %v209
    %v751 = vunpack.c.l.b16 %v210
    %v752 = vunpack.c.h.b16 %v210
    %v753 = vunpack.c.l.b16 %v211
    %v754 = vunpack.c.h.b16 %v211
    %v755 = vunpack.c.l.b16 %v212
    %v756 = vunpack.c.h.b16 %v212
    %v757 = vunpack.c.l.b16 %v213
    %v758 = vunpack.c.h.b16 %v213
    %v759 = vunpack.c.l.b16 %v214
    %v760 = vunpack.c.h.b16 %v214
    %v761 = vunpack.c.l.b16 %v215
    %v762 = vunpack.c.h.b16 %v215
    %v763 = vunpack.c.l.b16 %v216
    %v764 = vunpack.c.h.b16 %v216
    %v765 = vunpack.c.l.b16 %v217
    %v766 = vunpack.c.h.b16 %v217
    %v767 = vunpack.c.l.b16 %v218
    %v768 = vunpack.c.h.b16 %v218
    %v769 = vunpack.c.l.b16 %v219
    %v770 = vunpack.c.h.b16 %v219
    %v771 = vunpack.c.l.b16 %v220
    %v772 = vunpack.c.h.b16 %v220
    %v773 = vunpack.c.l.b16 %v221
    %v774 = vunpack.c.h.b16 %v221
    %v775 = vunpack.c.l.b16 %v222
    %v776 = vunpack.c.h.b16 %v222
    %v777 = vunpack.c.l.b16 %v223
    %v778 = vunpack.c.h.b16 %v223
    %v779 = vunpack.c.l.b16 %v224
    %v780 = vunpack.c.h.b16 %v224
    %v781 = vunpack.c.l.b16 %v225
    %v782 = vunpack.c.h.b16 %v225
    %v783 = vunpack.c.l.b16 %v226
    %v784 = vunpack.c.h.b16 %v226
    %v785 = vunpack.c.l.b16 %v227
    %v786 = vunpack.c.h.b16 %v227
    %v787 = vunpack.c.l.b16 %v228
    %v788 = vunpack.c.h.b16 %v228
    %v789 = vunpack.c.l.b16 %v229
    %v790 = vunpack.c.h.b16 %v229
    %v791 = vunpack.c.l.b16 %v230
    %v792 = vunpack.c.h.b16 %v230
    %v793 = vunpack.c.l.b16 %v231
    %v794 = vunpack.c.h.b16 %v231
    %v795 = vunpack.c.l.b16 %v232
    %v796 = vunpack.c.h.b16 %v232
    %v797 = vunpack.c.l.b16 %v233
    %v798 = vunpack.c.h.b16 %v233
    %v799 = vunpack.c.l.b16 %v234
    %v800 = vunpack.c.h.b16 %v234
    %v801 = vunpack.c.l.b16 %v235
    %v802 = vunpack.c.h.b16 %v235
    %v803 = vunpack.c.l.b16 %v236
    %v804 = vunpack.c.h.b16 %v236
    %v805 = vunpack.c.l.b16 %v237
    %v806 = vunpack.c.h.b16 %v237
    %v807 = vunpack.c.l.b16 %v238
    %v808 = vunpack.c.h.b16 %v238
    %v809 = vunpack.c.l.b16 %v239
    %v810 = vunpack.c.h.b16 %v239
    %v811 = vunpack.c.l.b16 %v240
    %v812 = vunpack.c.h.b16 %v240
    %v813 = vunpack.c.l.b16 %v241
    %v814 = vunpack.c.h.b16 %v241
    %v815 = vunpack.c.l.b16 %v242
    %v816 = vunpack.c.h.b16 %v242
    %v817 = vunpack.c.l.b16 %v243
    %v818 = vunpack.c.h.b16 %v243
    %v819 = vunpack.c.l.b16 %v244
    %v820 = vunpack.c.h.b16 %v244
    %v821 = vpack.c.b16 %v731, %v725
    %v822 = vpack.c.b16 %v732, %v726
    %v823 = vpack.c.b16 %v733, %v727
    %v824 = vpack.c.b16 %v734, %v728
    %v825 = vpack.c.b16 %v735, %v729
    %v826 = vpack.c.b16 %v736, %v730
    %v827 = vpack.c.b16 %v743, %v737
    %v828 = vpack.c.b16 %v744, %v738
    %v829 = vpack.c.b16 %v745, %v739
    %v830 = vpack.c.b16 %v746, %v740
    %v831 = vpack.c.b16 %v747, %v741
    %v832 = vpack.c.b16 %v748, %v742
    %v833 = vpack.c.b16 %v755, %v749
    %v834 = vpack.c.b16 %v756, %v750
    %v835 = vpack.c.b16 %v757, %v751
    %v836 = vpack.c.b16 %v758, %v752
    %v837 = vpack.c.b16 %v759, %v753
    %v838 = vpack.c.b16 %v760, %v754
    %v839 = vpack.c.b16 %v767, %v761
    %v840 = vpack.c.b16 %v768, %v762
    %v841 = vpack.c.b16 %v769, %v763
    %v842 = vpack.c.b16 %v770, %v764
    %v843 = vpack.c.b16 %v771, %v765
    %v844 = vpack.c.b16 %v772, %v766
    %v845 = vpack.c.b16 %v779, %v773
    %v846 = vpack.c.b16 %v780, %v774
    %v847 = vpack.c.b16 %v781, %v775
    %v848 = vpack.c.b16 %v782, %v776
    %v849 = vpack.c.b16 %v783, %v777
    %v850 = vpack.c.b16 %v784, %v778
    %v851 = vpack.c.b16 %v791, %v785
    %v852 = vpack.c.b16 %v792, %v786
    %v853 = vpack.c.b16 %v793, %v787
    %v854 = vpack.c.b16 %v794, %v788
    %v855 = vpack.c.b16 %v795, %v789
    %v856 = vpack.c.b16 %v796, %v790
    %v857 = vpack.c.b16 %v803, %v797
    %v858 = vpack.c.b16 %v804, %v798
    %v859 = vpack.c.b16 %v805, %v799
    %v860 = vpack.c.b16 %v806, %v800
    %v861 = vpack.c.b16 %v807, %v801
    %v862 = vpack.c.b16 %v808, %v802
    %v863 = vpack.c.b16 %v815, %v809
    %v864 = vpack.c.b16 %v816, %v810
    %v865 = vpack.c.b16 %v817, %v811
    %v866 = vpack.c.b16 %v818, %v812
    %v867 = vpack.c.b16 %v819, %v813
    %v868 = vpack.c.b16 %v820, %v814
    %917 = vmatprep.subr.bf16.mxu0 %v864
    %918 = vmatpush1.bf16.msra.mxu0 %v863
    %919 = vmatprep.subr.bf16.mxu0 %v858
    %920 = vmatpush1.bf16.msra.mxu0 %v857
    %921 = vmatprep.subr.bf16.mxu0 %v852
    %922 = vmatpush1.bf16.msra.mxu0 %v851
    %923 = vmatprep.subr.bf16.mxu0 %v846
    %924 = vmatpush1.bf16.msra.mxu0 %v845
    %925 = vmatprep.subr.bf16.mxu0 %v840
    %926 = vmatpush1.bf16.msra.mxu0 %v839
    %927 = vmatprep.subr.bf16.mxu0 %v834
    %928 = vmatpush1.bf16.msra.mxu0 %v833
    %929 = vmatprep.subr.bf16.mxu0 %v828
    %930 = vmatpush1.bf16.msra.mxu0 %v827
    %931 = vmatprep.subr.bf16.mxu0 %v822
    %932 = vmatpush1.bf16.msra.mxu0 %v821
    %933 = vmatprep.subr.bf16.mxu0 0
    %934 = vmatpush2.bf16.msra.mxu0 0
    %935 = vmatprep.subr.bf16.mxu0 0
    %936 = vmatpush2.bf16.msra.mxu0 0
    %937 = vmatprep.subr.bf16.mxu0 0
    %938 = vmatpush2.bf16.msra.mxu0 0
    %939 = vmatprep.subr.bf16.mxu0 0
    %940 = vmatpush2.bf16.msra.mxu0 0
    %941 = vmatprep.subr.bf16.mxu0 0
    %942 = vmatpush2.bf16.msra.mxu0 0
    %943 = vmatprep.subr.bf16.mxu0 0
    %944 = vmatpush2.bf16.msra.mxu0 0
    %945 = vmatprep.subr.bf16.mxu0 0
    %946 = vmatpush2.bf16.msra.mxu0 0
    %947 = vmatprep.subr.bf16.mxu0 0
    %948 = vmatpush2.bf16.msra.mxu0 0
    %949 = vmatprep.mubr.bf16.mxu0 0
    %950 = vmatmul.mubr.bf16.gmra.mxu0 %v676
    %v951 = vpop.f32.mrf.mxu0
    %v952 = vadd.f32 0.0, %v951
    %v953 = vpop.f32.mrf.mxu0
    %v954 = vadd.f32 0.0, %v953
    %v955 = vpop.f32.mrf.mxu0
    %v956 = vpop.f32.mrf.mxu0
    %957 = vdwg.mxu0
    %958 = vmatprep.subr.bf16.mxu0 %v866
    %959 = vmatpush1.bf16.msra.mxu0 %v865
    %960 = vmatprep.subr.bf16.mxu0 %v860
    %961 = vmatpush1.bf16.msra.mxu0 %v859
    %962 = vmatprep.subr.bf16.mxu0 %v854
    %963 = vmatpush1.bf16.msra.mxu0 %v853
    %964 = vmatprep.subr.bf16.mxu0 %v848
    %965 = vmatpush1.bf16.msra.mxu0 %v847
    %966 = vmatprep.subr.bf16.mxu0 %v842
    %967 = vmatpush1.bf16.msra.mxu0 %v841
    %968 = vmatprep.subr.bf16.mxu0 %v836
    %969 = vmatpush1.bf16.msra.mxu0 %v835
    %970 = vmatprep.subr.bf16.mxu0 %v830
    %971 = vmatpush1.bf16.msra.mxu0 %v829
    %972 = vmatprep.subr.bf16.mxu0 %v824
    %973 = vmatpush1.bf16.msra.mxu0 %v823
    %974 = vmatprep.subr.bf16.mxu0 0
    %975 = vmatpush2.bf16.msra.mxu0 0
    %976 = vmatprep.subr.bf16.mxu0 0
    %977 = vmatpush2.bf16.msra.mxu0 0
    %978 = vmatprep.subr.bf16.mxu0 0
    %979 = vmatpush2.bf16.msra.mxu0 0
    %980 = vmatprep.subr.bf16.mxu0 0
    %981 = vmatpush2.bf16.msra.mxu0 0
    %982 = vmatprep.subr.bf16.mxu0 0
    %983 = vmatpush2.bf16.msra.mxu0 0
    %984 = vmatprep.subr.bf16.mxu0 0
    %985 = vmatpush2.bf16.msra.mxu0 0
    %986 = vmatprep.subr.bf16.mxu0 0
    %987 = vmatpush2.bf16.msra.mxu0 0
    %988 = vmatprep.subr.bf16.mxu0 0
    %989 = vmatpush2.bf16.msra.mxu0 0
    %990 = vmatprep.mubr.bf16.mxu0 0
    %991 = vmatmul.mubr.bf16.gmra.mxu0 %v676
    %v992 = vpop.f32.mrf.mxu0
    %v993 = vadd.f32 0.0, %v992
    %v994 = vpop.f32.mrf.mxu0
    %v995 = vadd.f32 0.0, %v994
    %v996 = vpop.f32.mrf.mxu0
    %v997 = vpop.f32.mrf.mxu0
    %998 = vdwg.mxu0
    %999 = vmatprep.subr.bf16.mxu0 %v868
    %1000 = vmatpush1.bf16.msra.mxu0 %v867
    %1001 = vmatprep.subr.bf16.mxu0 %v862
    %1002 = vmatpush1.bf16.msra.mxu0 %v861
    %1003 = vmatprep.subr.bf16.mxu0 %v856
    %1004 = vmatpush1.bf16.msra.mxu0 %v855
    %1005 = vmatprep.subr.bf16.mxu0 %v850
    %1006 = vmatpush1.bf16.msra.mxu0 %v849
    %1007 = vmatprep.subr.bf16.mxu0 %v844
    %1008 = vmatpush1.bf16.msra.mxu0 %v843
    %1009 = vmatprep.subr.bf16.mxu0 %v838
    %1010 = vmatpush1.bf16.msra.mxu0 %v837
    %1011 = vmatprep.subr.bf16.mxu0 %v832
    %1012 = vmatpush1.bf16.msra.mxu0 %v831
    %1013 = vmatprep.subr.bf16.mxu0 %v826
    %1014 = vmatpush1.bf16.msra.mxu0 %v825
    %1015 = vmatprep.subr.bf16.mxu0 0
    %1016 = vmatpush2.bf16.msra.mxu0 0
    %1017 = vmatprep.subr.bf16.mxu0 0
    %1018 = vmatpush2.bf16.msra.mxu0 0
    %1019 = vmatprep.subr.bf16.mxu0 0
    %1020 = vmatpush2.bf16.msra.mxu0 0
    %1021 = vmatprep.subr.bf16.mxu0 0
    %1022 = vmatpush2.bf16.msra.mxu0 0
    %1023 = vmatprep.subr.bf16.mxu0 0
    %1024 = vmatpush2.bf16.msra.mxu0 0
    %1025 = vmatprep.subr.bf16.mxu0 0
    %1026 = vmatpush2.bf16.msra.mxu0 0
    %1027 = vmatprep.subr.bf16.mxu0 0
    %1028 = vmatpush2.bf16.msra.mxu0 0
    %1029 = vmatprep.subr.bf16.mxu0 0
    %1030 = vmatpush2.bf16.msra.mxu0 0
    %1031 = vmatprep.mubr.bf16.mxu0 0
    %1032 = vmatmul.mubr.bf16.gmra.mxu0 %v676
    %v1033 = vpop.f32.mrf.mxu0
    %v1034 = vadd.f32 0.0, %v1033
    %v1035 = vpop.f32.mrf.mxu0
    %v1036 = vadd.f32 0.0, %v1035
    %v1037 = vpop.f32.mrf.mxu0
    %v1038 = vpop.f32.mrf.mxu0
    %1039 = vdwg.mxu0
    %vm1040 = vcmp.ge.f32.partialorder %v952, 0.0
    %vm1041 = vcmp.ge.f32.partialorder %v954, 0.0
    %vm1042 = vcmp.ge.f32.partialorder %v993, 0.0
    %vm1043 = vcmp.ge.f32.partialorder %v995, 0.0
    %vm1044 = vcmp.ge.f32.partialorder %v1034, 0.0
    %vm1045 = vcmp.ge.f32.partialorder %v1036, 0.0
    %v1046 = vsel %vm1040, 0.007843138, -0.007843138
    %v1047 = vsel %vm1041, 0.007843138, -0.007843138
    %v1048 = vsel %vm1042, 0.007843138, -0.007843138
    %v1049 = vsel %vm1043, 0.007843138, -0.007843138
    %v1050 = vsel %vm1044, 0.007843138, -0.007843138
    %v1051 = vsel %vm1045, 0.007843138, -0.007843138
    %v1052 = vadd.f32 %v82, %v1046
    %v1053 = vadd.f32 %v83, %v1047
    %v1054 = vadd.f32 %v84, %v1048
    %v1055 = vadd.f32 %v85, %v1049
    %v1056 = vadd.f32 %v86, %v1050
    %v1057 = vadd.f32 %v87, %v1051
    %v1058 = vmax.f32 %v1052, %v88
    %v1059 = vmax.f32 %v1053, %v89
    %v1060 = vmax.f32 %v1054, %v90
    %v1061 = vmax.f32 %v1055, %v91
    %v1062 = vmax.f32 %v1056, %v92
    %v1063 = vmax.f32 %v1057, %v93
    %v1064 = vmin.f32 %v1058, %v94
    %v1065 = vmin.f32 %v1059, %v95
    %v1066 = vmin.f32 %v1060, %v96
    %v1067 = vmin.f32 %v1061, %v97
    %v1068 = vmin.f32 %v1062, %v98
    %v1069 = vmin.f32 %v1063, %v99
    %v1070 = vpack.c.bf16 %v1064, %v1064
    %v1071 = vpack.c.bf16 %v1065, %v1065
    %v1072 = vpack.c.bf16 %v1066, %v1066
    %v1073 = vpack.c.bf16 %v1067, %v1067
    %v1074 = vpack.c.bf16 %v1068, %v1068
    %v1075 = vpack.c.bf16 %v1069, %v1069
    %1076 = vmatprep.subr.bf16.mxu0 0
    %1077 = vmatpush1.bf16.msra.mxu0 %v457
    %1078 = vmatprep.subr.bf16.mxu0 0
    %1079 = vmatpush1.bf16.msra.mxu0 %v456
    %1080 = vmatprep.subr.bf16.mxu0 0
    %1081 = vmatpush1.bf16.msra.mxu0 %v455
    %1082 = vmatprep.subr.bf16.mxu0 0
    %1083 = vmatpush1.bf16.msra.mxu0 %v454
    %1084 = vmatprep.subr.bf16.mxu0 0
    %1085 = vmatpush1.bf16.msra.mxu0 %v453
    %1086 = vmatprep.subr.bf16.mxu0 0
    %1087 = vmatpush1.bf16.msra.mxu0 %v452
    %1088 = vmatprep.subr.bf16.mxu0 0
    %1089 = vmatpush1.bf16.msra.mxu0 %v451
    %1090 = vmatprep.subr.bf16.mxu0 0
    %1091 = vmatpush1.bf16.msra.mxu0 %v450
    %1092 = vmatprep.subr.bf16.mxu0 0
    %1093 = vmatpush2.bf16.msra.mxu0 %v465
    %1094 = vmatprep.subr.bf16.mxu0 0
    %1095 = vmatpush2.bf16.msra.mxu0 %v464
    %1096 = vmatprep.subr.bf16.mxu0 0
    %1097 = vmatpush2.bf16.msra.mxu0 %v463
    %1098 = vmatprep.subr.bf16.mxu0 0
    %1099 = vmatpush2.bf16.msra.mxu0 %v462
    %1100 = vmatprep.subr.bf16.mxu0 0
    %1101 = vmatpush2.bf16.msra.mxu0 %v461
    %1102 = vmatprep.subr.bf16.mxu0 0
    %1103 = vmatpush2.bf16.msra.mxu0 %v460
    %1104 = vmatprep.subr.bf16.mxu0 0
    %1105 = vmatpush2.bf16.msra.mxu0 %v459
    %1106 = vmatprep.subr.bf16.mxu0 0
    %1107 = vmatpush2.bf16.msra.mxu0 %v458
    %1108 = vmatprep.mubr.bf16.mxu0 %v1071
    %1109 = vmatmul.mubr.bf16.gmra.mxu0 %v1070
    %v1110 = vpop.f32.mrf.mxu0
    %v1111 = vadd.f32 %v256, %v1110
    %v1112 = vpop.f32.mrf.mxu0
    %v1113 = vpop.f32.mrf.mxu0
    %v1114 = vpop.f32.mrf.mxu0
    %1115 = vdwg.mxu0
    %1116 = vmatprep.subr.bf16.mxu0 0
    %1117 = vmatpush1.bf16.msra.mxu0 %v473
    %1118 = vmatprep.subr.bf16.mxu0 0
    %1119 = vmatpush1.bf16.msra.mxu0 %v472
    %1120 = vmatprep.subr.bf16.mxu0 0
    %1121 = vmatpush1.bf16.msra.mxu0 %v471
    %1122 = vmatprep.subr.bf16.mxu0 0
    %1123 = vmatpush1.bf16.msra.mxu0 %v470
    %1124 = vmatprep.subr.bf16.mxu0 0
    %1125 = vmatpush1.bf16.msra.mxu0 %v469
    %1126 = vmatprep.subr.bf16.mxu0 0
    %1127 = vmatpush1.bf16.msra.mxu0 %v468
    %1128 = vmatprep.subr.bf16.mxu0 0
    %1129 = vmatpush1.bf16.msra.mxu0 %v467
    %1130 = vmatprep.subr.bf16.mxu0 0
    %1131 = vmatpush1.bf16.msra.mxu0 %v466
    %1132 = vmatprep.subr.bf16.mxu0 0
    %1133 = vmatpush2.bf16.msra.mxu0 %v481
    %1134 = vmatprep.subr.bf16.mxu0 0
    %1135 = vmatpush2.bf16.msra.mxu0 %v480
    %1136 = vmatprep.subr.bf16.mxu0 0
    %1137 = vmatpush2.bf16.msra.mxu0 %v479
    %1138 = vmatprep.subr.bf16.mxu0 0
    %1139 = vmatpush2.bf16.msra.mxu0 %v478
    %1140 = vmatprep.subr.bf16.mxu0 0
    %1141 = vmatpush2.bf16.msra.mxu0 %v477
    %1142 = vmatprep.subr.bf16.mxu0 0
    %1143 = vmatpush2.bf16.msra.mxu0 %v476
    %1144 = vmatprep.subr.bf16.mxu0 0
    %1145 = vmatpush2.bf16.msra.mxu0 %v475
    %1146 = vmatprep.subr.bf16.mxu0 0
    %1147 = vmatpush2.bf16.msra.mxu0 %v474
    %1148 = vmatprep.mubr.bf16.mxu0 %v1073
    %1149 = vmatmul.mubr.bf16.gmra.mxu0 %v1072
    %v1150 = vpop.f32.mrf.mxu0
    %v1151 = vadd.f32 %v1111, %v1150
    %v1152 = vpop.f32.mrf.mxu0
    %v1153 = vpop.f32.mrf.mxu0
    %v1154 = vpop.f32.mrf.mxu0
    %1155 = vdwg.mxu0
    %1156 = vmatprep.subr.bf16.mxu0 0
    %1157 = vmatpush1.bf16.msra.mxu0 %v489
    %1158 = vmatprep.subr.bf16.mxu0 0
    %1159 = vmatpush1.bf16.msra.mxu0 %v488
    %1160 = vmatprep.subr.bf16.mxu0 0
    %1161 = vmatpush1.bf16.msra.mxu0 %v487
    %1162 = vmatprep.subr.bf16.mxu0 0
    %1163 = vmatpush1.bf16.msra.mxu0 %v486
    %1164 = vmatprep.subr.bf16.mxu0 0
    %1165 = vmatpush1.bf16.msra.mxu0 %v485
    %1166 = vmatprep.subr.bf16.mxu0 0
    %1167 = vmatpush1.bf16.msra.mxu0 %v484
    %1168 = vmatprep.subr.bf16.mxu0 0
    %1169 = vmatpush1.bf16.msra.mxu0 %v483
    %1170 = vmatprep.subr.bf16.mxu0 0
    %1171 = vmatpush1.bf16.msra.mxu0 %v482
    %1172 = vmatprep.subr.bf16.mxu0 0
    %1173 = vmatpush2.bf16.msra.mxu0 %v497
    %1174 = vmatprep.subr.bf16.mxu0 0
    %1175 = vmatpush2.bf16.msra.mxu0 %v496
    %1176 = vmatprep.subr.bf16.mxu0 0
    %1177 = vmatpush2.bf16.msra.mxu0 %v495
    %1178 = vmatprep.subr.bf16.mxu0 0
    %1179 = vmatpush2.bf16.msra.mxu0 %v494
    %1180 = vmatprep.subr.bf16.mxu0 0
    %1181 = vmatpush2.bf16.msra.mxu0 %v493
    %1182 = vmatprep.subr.bf16.mxu0 0
    %1183 = vmatpush2.bf16.msra.mxu0 %v492
    %1184 = vmatprep.subr.bf16.mxu0 0
    %1185 = vmatpush2.bf16.msra.mxu0 %v491
    %1186 = vmatprep.subr.bf16.mxu0 0
    %1187 = vmatpush2.bf16.msra.mxu0 %v490
    %1188 = vmatprep.mubr.bf16.mxu0 %v1075
    %1189 = vmatmul.mubr.bf16.gmra.mxu0 %v1074
    %v1190 = vpop.f32.mrf.mxu0
    %v1191 = vadd.f32 %v1151, %v1190
    %v1192 = vpop.f32.mrf.mxu0
    %v1193 = vpop.f32.mrf.mxu0
    %v1194 = vpop.f32.mrf.mxu0
    %1195 = vdwg.mxu0
    %1196 = vmax.xlane.f32.xlu0 %v1191
    %v1197 = vpop.xlane.xlu0 %1196
    %v1198 = vsub.f32 %v1191, %v1197
    %v1199 = vmul.f32 %v1198, 1.442695
    %v1200 = vpow.pop %v1199
    %1201 = vadd.xlane.f32.xlu0 %v1200
    %v1202 = vpop.xlane.xlu0 %1201
    %v1203 = vrcp.pop %v1202
    %v1204 = vmul.f32 %v1200, %v1203
    %v1205 = vsub.f32 %v1204, %v100
    %v1206 = vpack.c.bf16 %v1205, %v1205
    %1207 = vmatprep.subr.bf16.mxu0 %v864
    %1208 = vmatpush1.bf16.msra.mxu0 %v863
    %1209 = vmatprep.subr.bf16.mxu0 %v858
    %1210 = vmatpush1.bf16.msra.mxu0 %v857
    %1211 = vmatprep.subr.bf16.mxu0 %v852
    %1212 = vmatpush1.bf16.msra.mxu0 %v851
    %1213 = vmatprep.subr.bf16.mxu0 %v846
    %1214 = vmatpush1.bf16.msra.mxu0 %v845
    %1215 = vmatprep.subr.bf16.mxu0 %v840
    %1216 = vmatpush1.bf16.msra.mxu0 %v839
    %1217 = vmatprep.subr.bf16.mxu0 %v834
    %1218 = vmatpush1.bf16.msra.mxu0 %v833
    %1219 = vmatprep.subr.bf16.mxu0 %v828
    %1220 = vmatpush1.bf16.msra.mxu0 %v827
    %1221 = vmatprep.subr.bf16.mxu0 %v822
    %1222 = vmatpush1.bf16.msra.mxu0 %v821
    %1223 = vmatprep.subr.bf16.mxu0 0
    %1224 = vmatpush2.bf16.msra.mxu0 0
    %1225 = vmatprep.subr.bf16.mxu0 0
    %1226 = vmatpush2.bf16.msra.mxu0 0
    %1227 = vmatprep.subr.bf16.mxu0 0
    %1228 = vmatpush2.bf16.msra.mxu0 0
    %1229 = vmatprep.subr.bf16.mxu0 0
    %1230 = vmatpush2.bf16.msra.mxu0 0
    %1231 = vmatprep.subr.bf16.mxu0 0
    %1232 = vmatpush2.bf16.msra.mxu0 0
    %1233 = vmatprep.subr.bf16.mxu0 0
    %1234 = vmatpush2.bf16.msra.mxu0 0
    %1235 = vmatprep.subr.bf16.mxu0 0
    %1236 = vmatpush2.bf16.msra.mxu0 0
    %1237 = vmatprep.subr.bf16.mxu0 0
    %1238 = vmatpush2.bf16.msra.mxu0 0
    %1239 = vmatprep.mubr.bf16.mxu0 0
    %1240 = vmatmul.mubr.bf16.gmra.mxu0 %v1206
    %v1241 = vpop.f32.mrf.mxu0
    %v1242 = vadd.f32 0.0, %v1241
    %v1243 = vpop.f32.mrf.mxu0
    %v1244 = vadd.f32 0.0, %v1243
    %v1245 = vpop.f32.mrf.mxu0
    %v1246 = vpop.f32.mrf.mxu0
    %1247 = vdwg.mxu0
    %1248 = vmatprep.subr.bf16.mxu0 %v866
    %1249 = vmatpush1.bf16.msra.mxu0 %v865
    %1250 = vmatprep.subr.bf16.mxu0 %v860
    %1251 = vmatpush1.bf16.msra.mxu0 %v859
    %1252 = vmatprep.subr.bf16.mxu0 %v854
    %1253 = vmatpush1.bf16.msra.mxu0 %v853
    %1254 = vmatprep.subr.bf16.mxu0 %v848
    %1255 = vmatpush1.bf16.msra.mxu0 %v847
    %1256 = vmatprep.subr.bf16.mxu0 %v842
    %1257 = vmatpush1.bf16.msra.mxu0 %v841
    %1258 = vmatprep.subr.bf16.mxu0 %v836
    %1259 = vmatpush1.bf16.msra.mxu0 %v835
    %1260 = vmatprep.subr.bf16.mxu0 %v830
    %1261 = vmatpush1.bf16.msra.mxu0 %v829
    %1262 = vmatprep.subr.bf16.mxu0 %v824
    %1263 = vmatpush1.bf16.msra.mxu0 %v823
    %1264 = vmatprep.subr.bf16.mxu0 0
    %1265 = vmatpush2.bf16.msra.mxu0 0
    %1266 = vmatprep.subr.bf16.mxu0 0
    %1267 = vmatpush2.bf16.msra.mxu0 0
    %1268 = vmatprep.subr.bf16.mxu0 0
    %1269 = vmatpush2.bf16.msra.mxu0 0
    %1270 = vmatprep.subr.bf16.mxu0 0
    %1271 = vmatpush2.bf16.msra.mxu0 0
    %1272 = vmatprep.subr.bf16.mxu0 0
    %1273 = vmatpush2.bf16.msra.mxu0 0
    %1274 = vmatprep.subr.bf16.mxu0 0
    %1275 = vmatpush2.bf16.msra.mxu0 0
    %1276 = vmatprep.subr.bf16.mxu0 0
    %1277 = vmatpush2.bf16.msra.mxu0 0
    %1278 = vmatprep.subr.bf16.mxu0 0
    %1279 = vmatpush2.bf16.msra.mxu0 0
    %1280 = vmatprep.mubr.bf16.mxu0 0
    %1281 = vmatmul.mubr.bf16.gmra.mxu0 %v1206
    %v1282 = vpop.f32.mrf.mxu0
    %v1283 = vadd.f32 0.0, %v1282
    %v1284 = vpop.f32.mrf.mxu0
    %v1285 = vadd.f32 0.0, %v1284
    %v1286 = vpop.f32.mrf.mxu0
    %v1287 = vpop.f32.mrf.mxu0
    %1288 = vdwg.mxu0
    %1289 = vmatprep.subr.bf16.mxu0 %v868
    %1290 = vmatpush1.bf16.msra.mxu0 %v867
    %1291 = vmatprep.subr.bf16.mxu0 %v862
    %1292 = vmatpush1.bf16.msra.mxu0 %v861
    %1293 = vmatprep.subr.bf16.mxu0 %v856
    %1294 = vmatpush1.bf16.msra.mxu0 %v855
    %1295 = vmatprep.subr.bf16.mxu0 %v850
    %1296 = vmatpush1.bf16.msra.mxu0 %v849
    %1297 = vmatprep.subr.bf16.mxu0 %v844
    %1298 = vmatpush1.bf16.msra.mxu0 %v843
    %1299 = vmatprep.subr.bf16.mxu0 %v838
    %1300 = vmatpush1.bf16.msra.mxu0 %v837
    %1301 = vmatprep.subr.bf16.mxu0 %v832
    %1302 = vmatpush1.bf16.msra.mxu0 %v831
    %1303 = vmatprep.subr.bf16.mxu0 %v826
    %1304 = vmatpush1.bf16.msra.mxu0 %v825
    %1305 = vmatprep.subr.bf16.mxu0 0
    %1306 = vmatpush2.bf16.msra.mxu0 0
    %1307 = vmatprep.subr.bf16.mxu0 0
    %1308 = vmatpush2.bf16.msra.mxu0 0
    %1309 = vmatprep.subr.bf16.mxu0 0
    %1310 = vmatpush2.bf16.msra.mxu0 0
    %1311 = vmatprep.subr.bf16.mxu0 0
    %1312 = vmatpush2.bf16.msra.mxu0 0
    %1313 = vmatprep.subr.bf16.mxu0 0
    %1314 = vmatpush2.bf16.msra.mxu0 0
    %1315 = vmatprep.subr.bf16.mxu0 0
    %1316 = vmatpush2.bf16.msra.mxu0 0
    %1317 = vmatprep.subr.bf16.mxu0 0
    %1318 = vmatpush2.bf16.msra.mxu0 0
    %1319 = vmatprep.subr.bf16.mxu0 0
    %1320 = vmatpush2.bf16.msra.mxu0 0
    %1321 = vmatprep.mubr.bf16.mxu0 0
    %1322 = vmatmul.mubr.bf16.gmra.mxu0 %v1206
    %v1323 = vpop.f32.mrf.mxu0
    %v1324 = vadd.f32 0.0, %v1323
    %v1325 = vpop.f32.mrf.mxu0
    %v1326 = vadd.f32 0.0, %v1325
    %v1327 = vpop.f32.mrf.mxu0
    %v1328 = vpop.f32.mrf.mxu0
    %1329 = vdwg.mxu0
    %vm1330 = vcmp.ge.f32.partialorder %v1242, 0.0
    %vm1331 = vcmp.ge.f32.partialorder %v1244, 0.0
    %vm1332 = vcmp.ge.f32.partialorder %v1283, 0.0
    %vm1333 = vcmp.ge.f32.partialorder %v1285, 0.0
    %vm1334 = vcmp.ge.f32.partialorder %v1324, 0.0
    %vm1335 = vcmp.ge.f32.partialorder %v1326, 0.0
    %v1336 = vsel %vm1330, 0.007843138, -0.007843138
    %v1337 = vsel %vm1331, 0.007843138, -0.007843138
    %v1338 = vsel %vm1332, 0.007843138, -0.007843138
    %v1339 = vsel %vm1333, 0.007843138, -0.007843138
    %v1340 = vsel %vm1334, 0.007843138, -0.007843138
    %v1341 = vsel %vm1335, 0.007843138, -0.007843138
    %v1342 = vadd.f32 %v1064, %v1336
    %v1343 = vadd.f32 %v1065, %v1337
    %v1344 = vadd.f32 %v1066, %v1338
    %v1345 = vadd.f32 %v1067, %v1339
    %v1346 = vadd.f32 %v1068, %v1340
    %v1347 = vadd.f32 %v1069, %v1341
    %v1348 = vmax.f32 %v1342, %v88
    %v1349 = vmax.f32 %v1343, %v89
    %v1350 = vmax.f32 %v1344, %v90
    %v1351 = vmax.f32 %v1345, %v91
    %v1352 = vmax.f32 %v1346, %v92
    %v1353 = vmax.f32 %v1347, %v93
    %v1354 = vmin.f32 %v1348, %v94
    %v1355 = vmin.f32 %v1349, %v95
    %v1356 = vmin.f32 %v1350, %v96
    %v1357 = vmin.f32 %v1351, %v97
    %v1358 = vmin.f32 %v1352, %v98
    %v1359 = vmin.f32 %v1353, %v99
    %v1360 = vpack.c.bf16 %v1354, %v1354
    %v1361 = vpack.c.bf16 %v1355, %v1355
    %v1362 = vpack.c.bf16 %v1356, %v1356
    %v1363 = vpack.c.bf16 %v1357, %v1357
    %v1364 = vpack.c.bf16 %v1358, %v1358
    %v1365 = vpack.c.bf16 %v1359, %v1359
    %1366 = vmatprep.subr.bf16.mxu0 0
    %1367 = vmatpush1.bf16.msra.mxu0 %v457
    %1368 = vmatprep.subr.bf16.mxu0 0
    %1369 = vmatpush1.bf16.msra.mxu0 %v456
    %1370 = vmatprep.subr.bf16.mxu0 0
    %1371 = vmatpush1.bf16.msra.mxu0 %v455
    %1372 = vmatprep.subr.bf16.mxu0 0
    %1373 = vmatpush1.bf16.msra.mxu0 %v454
    %1374 = vmatprep.subr.bf16.mxu0 0
    %1375 = vmatpush1.bf16.msra.mxu0 %v453
    %1376 = vmatprep.subr.bf16.mxu0 0
    %1377 = vmatpush1.bf16.msra.mxu0 %v452
    %1378 = vmatprep.subr.bf16.mxu0 0
    %1379 = vmatpush1.bf16.msra.mxu0 %v451
    %1380 = vmatprep.subr.bf16.mxu0 0
    %1381 = vmatpush1.bf16.msra.mxu0 %v450
    %1382 = vmatprep.subr.bf16.mxu0 0
    %1383 = vmatpush2.bf16.msra.mxu0 %v465
    %1384 = vmatprep.subr.bf16.mxu0 0
    %1385 = vmatpush2.bf16.msra.mxu0 %v464
    %1386 = vmatprep.subr.bf16.mxu0 0
    %1387 = vmatpush2.bf16.msra.mxu0 %v463
    %1388 = vmatprep.subr.bf16.mxu0 0
    %1389 = vmatpush2.bf16.msra.mxu0 %v462
    %1390 = vmatprep.subr.bf16.mxu0 0
    %1391 = vmatpush2.bf16.msra.mxu0 %v461
    %1392 = vmatprep.subr.bf16.mxu0 0
    %1393 = vmatpush2.bf16.msra.mxu0 %v460
    %1394 = vmatprep.subr.bf16.mxu0 0
    %1395 = vmatpush2.bf16.msra.mxu0 %v459
    %1396 = vmatprep.subr.bf16.mxu0 0
    %1397 = vmatpush2.bf16.msra.mxu0 %v458
    %1398 = vmatprep.mubr.bf16.mxu0 %v1361
    %1399 = vmatmul.mubr.bf16.gmra.mxu0 %v1360
    %v1400 = vpop.f32.mrf.mxu0
    %v1401 = vadd.f32 %v256, %v1400
    %v1402 = vpop.f32.mrf.mxu0
    %v1403 = vpop.f32.mrf.mxu0
    %v1404 = vpop.f32.mrf.mxu0
    %1405 = vdwg.mxu0
    %1406 = vmatprep.subr.bf16.mxu0 0
    %1407 = vmatpush1.bf16.msra.mxu0 %v473
    %1408 = vmatprep.subr.bf16.mxu0 0
    %1409 = vmatpush1.bf16.msra.mxu0 %v472
    %1410 = vmatprep.subr.bf16.mxu0 0
    %1411 = vmatpush1.bf16.msra.mxu0 %v471
    %1412 = vmatprep.subr.bf16.mxu0 0
    %1413 = vmatpush1.bf16.msra.mxu0 %v470
    %1414 = vmatprep.subr.bf16.mxu0 0
    %1415 = vmatpush1.bf16.msra.mxu0 %v469
    %1416 = vmatprep.subr.bf16.mxu0 0
    %1417 = vmatpush1.bf16.msra.mxu0 %v468
    %1418 = vmatprep.subr.bf16.mxu0 0
    %1419 = vmatpush1.bf16.msra.mxu0 %v467
    %1420 = vmatprep.subr.bf16.mxu0 0
    %1421 = vmatpush1.bf16.msra.mxu0 %v466
    %1422 = vmatprep.subr.bf16.mxu0 0
    %1423 = vmatpush2.bf16.msra.mxu0 %v481
    %1424 = vmatprep.subr.bf16.mxu0 0
    %1425 = vmatpush2.bf16.msra.mxu0 %v480
    %1426 = vmatprep.subr.bf16.mxu0 0
    %1427 = vmatpush2.bf16.msra.mxu0 %v479
    %1428 = vmatprep.subr.bf16.mxu0 0
    %1429 = vmatpush2.bf16.msra.mxu0 %v478
    %1430 = vmatprep.subr.bf16.mxu0 0
    %1431 = vmatpush2.bf16.msra.mxu0 %v477
    %1432 = vmatprep.subr.bf16.mxu0 0
    %1433 = vmatpush2.bf16.msra.mxu0 %v476
    %1434 = vmatprep.subr.bf16.mxu0 0
    %1435 = vmatpush2.bf16.msra.mxu0 %v475
    %1436 = vmatprep.subr.bf16.mxu0 0
    %1437 = vmatpush2.bf16.msra.mxu0 %v474
    %1438 = vmatprep.mubr.bf16.mxu0 %v1363
    %1439 = vmatmul.mubr.bf16.gmra.mxu0 %v1362
    %v1440 = vpop.f32.mrf.mxu0
    %v1441 = vadd.f32 %v1401, %v1440
    %v1442 = vpop.f32.mrf.mxu0
    %v1443 = vpop.f32.mrf.mxu0
    %v1444 = vpop.f32.mrf.mxu0
    %1445 = vdwg.mxu0
    %1446 = vmatprep.subr.bf16.mxu0 0
    %1447 = vmatpush1.bf16.msra.mxu0 %v489
    %1448 = vmatprep.subr.bf16.mxu0 0
    %1449 = vmatpush1.bf16.msra.mxu0 %v488
    %1450 = vmatprep.subr.bf16.mxu0 0
    %1451 = vmatpush1.bf16.msra.mxu0 %v487
    %1452 = vmatprep.subr.bf16.mxu0 0
    %1453 = vmatpush1.bf16.msra.mxu0 %v486
    %1454 = vmatprep.subr.bf16.mxu0 0
    %1455 = vmatpush1.bf16.msra.mxu0 %v485
    %1456 = vmatprep.subr.bf16.mxu0 0
    %1457 = vmatpush1.bf16.msra.mxu0 %v484
    %1458 = vmatprep.subr.bf16.mxu0 0
    %1459 = vmatpush1.bf16.msra.mxu0 %v483
    %1460 = vmatprep.subr.bf16.mxu0 0
    %1461 = vmatpush1.bf16.msra.mxu0 %v482
    %1462 = vmatprep.subr.bf16.mxu0 0
    %1463 = vmatpush2.bf16.msra.mxu0 %v497
    %1464 = vmatprep.subr.bf16.mxu0 0
    %1465 = vmatpush2.bf16.msra.mxu0 %v496
    %1466 = vmatprep.subr.bf16.mxu0 0
    %1467 = vmatpush2.bf16.msra.mxu0 %v495
    %1468 = vmatprep.subr.bf16.mxu0 0
    %1469 = vmatpush2.bf16.msra.mxu0 %v494
    %1470 = vmatprep.subr.bf16.mxu0 0
    %1471 = vmatpush2.bf16.msra.mxu0 %v493
    %1472 = vmatprep.subr.bf16.mxu0 0
    %1473 = vmatpush2.bf16.msra.mxu0 %v492
    %1474 = vmatprep.subr.bf16.mxu0 0
    %1475 = vmatpush2.bf16.msra.mxu0 %v491
    %1476 = vmatprep.subr.bf16.mxu0 0
    %1477 = vmatpush2.bf16.msra.mxu0 %v490
    %1478 = vmatprep.mubr.bf16.mxu0 %v1365
    %1479 = vmatmul.mubr.bf16.gmra.mxu0 %v1364
    %v1480 = vpop.f32.mrf.mxu0
    %v1481 = vadd.f32 %v1441, %v1480
    %v1482 = vpop.f32.mrf.mxu0
    %v1483 = vpop.f32.mrf.mxu0
    %v1484 = vpop.f32.mrf.mxu0
    %1485 = vdwg.mxu0
    %1486 = vmax.xlane.f32.xlu0 %v1481
    %v1487 = vpop.xlane.xlu0 %1486
    %v1488 = vsub.f32 %v1481, %v1487
    %v1489 = vmul.f32 %v1488, 1.442695
    %v1490 = vpow.pop %v1489
    %1491 = vadd.xlane.f32.xlu0 %v1490
    %v1492 = vpop.xlane.xlu0 %1491
    %v1493 = vrcp.pop %v1492
    %v1494 = vmul.f32 %v1490, %v1493
    %v1495 = vsub.f32 %v1494, %v100
    %v1496 = vpack.c.bf16 %v1495, %v1495
    %1497 = vmatprep.subr.bf16.mxu0 %v864
    %1498 = vmatpush1.bf16.msra.mxu0 %v863
    %1499 = vmatprep.subr.bf16.mxu0 %v858
    %1500 = vmatpush1.bf16.msra.mxu0 %v857
    %1501 = vmatprep.subr.bf16.mxu0 %v852
    %1502 = vmatpush1.bf16.msra.mxu0 %v851
    %1503 = vmatprep.subr.bf16.mxu0 %v846
    %1504 = vmatpush1.bf16.msra.mxu0 %v845
    %1505 = vmatprep.subr.bf16.mxu0 %v840
    %1506 = vmatpush1.bf16.msra.mxu0 %v839
    %1507 = vmatprep.subr.bf16.mxu0 %v834
    %1508 = vmatpush1.bf16.msra.mxu0 %v833
    %1509 = vmatprep.subr.bf16.mxu0 %v828
    %1510 = vmatpush1.bf16.msra.mxu0 %v827
    %1511 = vmatprep.subr.bf16.mxu0 %v822
    %1512 = vmatpush1.bf16.msra.mxu0 %v821
    %1513 = vmatprep.subr.bf16.mxu0 0
    %1514 = vmatpush2.bf16.msra.mxu0 0
    %1515 = vmatprep.subr.bf16.mxu0 0
    %1516 = vmatpush2.bf16.msra.mxu0 0
    %1517 = vmatprep.subr.bf16.mxu0 0
    %1518 = vmatpush2.bf16.msra.mxu0 0
    %1519 = vmatprep.subr.bf16.mxu0 0
    %1520 = vmatpush2.bf16.msra.mxu0 0
    %1521 = vmatprep.subr.bf16.mxu0 0
    %1522 = vmatpush2.bf16.msra.mxu0 0
    %1523 = vmatprep.subr.bf16.mxu0 0
    %1524 = vmatpush2.bf16.msra.mxu0 0
    %1525 = vmatprep.subr.bf16.mxu0 0
    %1526 = vmatpush2.bf16.msra.mxu0 0
    %1527 = vmatprep.subr.bf16.mxu0 0
    %1528 = vmatpush2.bf16.msra.mxu0 0
    %1529 = vmatprep.mubr.bf16.mxu0 0
    %1530 = vmatmul.mubr.bf16.gmra.mxu0 %v1496
    %v1531 = vpop.f32.mrf.mxu0
    %v1532 = vadd.f32 0.0, %v1531
    %v1533 = vpop.f32.mrf.mxu0
    %v1534 = vadd.f32 0.0, %v1533
    %v1535 = vpop.f32.mrf.mxu0
    %v1536 = vpop.f32.mrf.mxu0
    %1537 = vdwg.mxu0
    %1538 = vmatprep.subr.bf16.mxu0 %v866
    %1539 = vmatpush1.bf16.msra.mxu0 %v865
    %1540 = vmatprep.subr.bf16.mxu0 %v860
    %1541 = vmatpush1.bf16.msra.mxu0 %v859
    %1542 = vmatprep.subr.bf16.mxu0 %v854
    %1543 = vmatpush1.bf16.msra.mxu0 %v853
    %1544 = vmatprep.subr.bf16.mxu0 %v848
    %1545 = vmatpush1.bf16.msra.mxu0 %v847
    %1546 = vmatprep.subr.bf16.mxu0 %v842
    %1547 = vmatpush1.bf16.msra.mxu0 %v841
    %1548 = vmatprep.subr.bf16.mxu0 %v836
    %1549 = vmatpush1.bf16.msra.mxu0 %v835
    %1550 = vmatprep.subr.bf16.mxu0 %v830
    %1551 = vmatpush1.bf16.msra.mxu0 %v829
    %1552 = vmatprep.subr.bf16.mxu0 %v824
    %1553 = vmatpush1.bf16.msra.mxu0 %v823
    %1554 = vmatprep.subr.bf16.mxu0 0
    %1555 = vmatpush2.bf16.msra.mxu0 0
    %1556 = vmatprep.subr.bf16.mxu0 0
    %1557 = vmatpush2.bf16.msra.mxu0 0
    %1558 = vmatprep.subr.bf16.mxu0 0
    %1559 = vmatpush2.bf16.msra.mxu0 0
    %1560 = vmatprep.subr.bf16.mxu0 0
    %1561 = vmatpush2.bf16.msra.mxu0 0
    %1562 = vmatprep.subr.bf16.mxu0 0
    %1563 = vmatpush2.bf16.msra.mxu0 0
    %1564 = vmatprep.subr.bf16.mxu0 0
    %1565 = vmatpush2.bf16.msra.mxu0 0
    %1566 = vmatprep.subr.bf16.mxu0 0
    %1567 = vmatpush2.bf16.msra.mxu0 0
    %1568 = vmatprep.subr.bf16.mxu0 0
    %1569 = vmatpush2.bf16.msra.mxu0 0
    %1570 = vmatprep.mubr.bf16.mxu0 0
    %1571 = vmatmul.mubr.bf16.gmra.mxu0 %v1496
    %v1572 = vpop.f32.mrf.mxu0
    %v1573 = vadd.f32 0.0, %v1572
    %v1574 = vpop.f32.mrf.mxu0
    %v1575 = vadd.f32 0.0, %v1574
    %v1576 = vpop.f32.mrf.mxu0
    %v1577 = vpop.f32.mrf.mxu0
    %1578 = vdwg.mxu0
    %1579 = vmatprep.subr.bf16.mxu0 %v868
    %1580 = vmatpush1.bf16.msra.mxu0 %v867
    %1581 = vmatprep.subr.bf16.mxu0 %v862
    %1582 = vmatpush1.bf16.msra.mxu0 %v861
    %1583 = vmatprep.subr.bf16.mxu0 %v856
    %1584 = vmatpush1.bf16.msra.mxu0 %v855
    %1585 = vmatprep.subr.bf16.mxu0 %v850
    %1586 = vmatpush1.bf16.msra.mxu0 %v849
    %1587 = vmatprep.subr.bf16.mxu0 %v844
    %1588 = vmatpush1.bf16.msra.mxu0 %v843
    %1589 = vmatprep.subr.bf16.mxu0 %v838
    %1590 = vmatpush1.bf16.msra.mxu0 %v837
    %1591 = vmatprep.subr.bf16.mxu0 %v832
    %1592 = vmatpush1.bf16.msra.mxu0 %v831
    %1593 = vmatprep.subr.bf16.mxu0 %v826
    %1594 = vmatpush1.bf16.msra.mxu0 %v825
    %1595 = vmatprep.subr.bf16.mxu0 0
    %1596 = vmatpush2.bf16.msra.mxu0 0
    %1597 = vmatprep.subr.bf16.mxu0 0
    %1598 = vmatpush2.bf16.msra.mxu0 0
    %1599 = vmatprep.subr.bf16.mxu0 0
    %1600 = vmatpush2.bf16.msra.mxu0 0
    %1601 = vmatprep.subr.bf16.mxu0 0
    %1602 = vmatpush2.bf16.msra.mxu0 0
    %1603 = vmatprep.subr.bf16.mxu0 0
    %1604 = vmatpush2.bf16.msra.mxu0 0
    %1605 = vmatprep.subr.bf16.mxu0 0
    %1606 = vmatpush2.bf16.msra.mxu0 0
    %1607 = vmatprep.subr.bf16.mxu0 0
    %1608 = vmatpush2.bf16.msra.mxu0 0
    %1609 = vmatprep.subr.bf16.mxu0 0
    %1610 = vmatpush2.bf16.msra.mxu0 0
    %1611 = vmatprep.mubr.bf16.mxu0 0
    %1612 = vmatmul.mubr.bf16.gmra.mxu0 %v1496
    %v1613 = vpop.f32.mrf.mxu0
    %v1614 = vadd.f32 0.0, %v1613
    %v1615 = vpop.f32.mrf.mxu0
    %v1616 = vadd.f32 0.0, %v1615
    %v1617 = vpop.f32.mrf.mxu0
    %v1618 = vpop.f32.mrf.mxu0
    %1619 = vdwg.mxu0
    %vm1620 = vcmp.ge.f32.partialorder %v1532, 0.0
    %vm1621 = vcmp.ge.f32.partialorder %v1534, 0.0
    %vm1622 = vcmp.ge.f32.partialorder %v1573, 0.0
    %vm1623 = vcmp.ge.f32.partialorder %v1575, 0.0
    %vm1624 = vcmp.ge.f32.partialorder %v1614, 0.0
    %vm1625 = vcmp.ge.f32.partialorder %v1616, 0.0
    %v1626 = vsel %vm1620, 0.007843138, -0.007843138
    %v1627 = vsel %vm1621, 0.007843138, -0.007843138
    %v1628 = vsel %vm1622, 0.007843138, -0.007843138
    %v1629 = vsel %vm1623, 0.007843138, -0.007843138
    %v1630 = vsel %vm1624, 0.007843138, -0.007843138
    %v1631 = vsel %vm1625, 0.007843138, -0.007843138
    %v1632 = vadd.f32 %v1354, %v1626
    %v1633 = vadd.f32 %v1355, %v1627
    %v1634 = vadd.f32 %v1356, %v1628
    %v1635 = vadd.f32 %v1357, %v1629
    %v1636 = vadd.f32 %v1358, %v1630
    %v1637 = vadd.f32 %v1359, %v1631
    %v1638 = vmax.f32 %v1632, %v88
    %v1639 = vmax.f32 %v1633, %v89
    %v1640 = vmax.f32 %v1634, %v90
    %v1641 = vmax.f32 %v1635, %v91
    %v1642 = vmax.f32 %v1636, %v92
    %v1643 = vmax.f32 %v1637, %v93
    %v1644 = vmin.f32 %v1638, %v94
    %v1645 = vmin.f32 %v1639, %v95
    %v1646 = vmin.f32 %v1640, %v96
    %v1647 = vmin.f32 %v1641, %v97
    %v1648 = vmin.f32 %v1642, %v98
    %v1649 = vmin.f32 %v1643, %v99
    %v1650 = vpack.c.bf16 %v1644, %v1644
    %v1651 = vpack.c.bf16 %v1645, %v1645
    %v1652 = vpack.c.bf16 %v1646, %v1646
    %v1653 = vpack.c.bf16 %v1647, %v1647
    %v1654 = vpack.c.bf16 %v1648, %v1648
    %v1655 = vpack.c.bf16 %v1649, %v1649
    %1656 = vmatprep.subr.bf16.mxu0 0
    %1657 = vmatpush1.bf16.msra.mxu0 %v457
    %1658 = vmatprep.subr.bf16.mxu0 0
    %1659 = vmatpush1.bf16.msra.mxu0 %v456
    %1660 = vmatprep.subr.bf16.mxu0 0
    %1661 = vmatpush1.bf16.msra.mxu0 %v455
    %1662 = vmatprep.subr.bf16.mxu0 0
    %1663 = vmatpush1.bf16.msra.mxu0 %v454
    %1664 = vmatprep.subr.bf16.mxu0 0
    %1665 = vmatpush1.bf16.msra.mxu0 %v453
    %1666 = vmatprep.subr.bf16.mxu0 0
    %1667 = vmatpush1.bf16.msra.mxu0 %v452
    %1668 = vmatprep.subr.bf16.mxu0 0
    %1669 = vmatpush1.bf16.msra.mxu0 %v451
    %1670 = vmatprep.subr.bf16.mxu0 0
    %1671 = vmatpush1.bf16.msra.mxu0 %v450
    %1672 = vmatprep.subr.bf16.mxu0 0
    %1673 = vmatpush2.bf16.msra.mxu0 %v465
    %1674 = vmatprep.subr.bf16.mxu0 0
    %1675 = vmatpush2.bf16.msra.mxu0 %v464
    %1676 = vmatprep.subr.bf16.mxu0 0
    %1677 = vmatpush2.bf16.msra.mxu0 %v463
    %1678 = vmatprep.subr.bf16.mxu0 0
    %1679 = vmatpush2.bf16.msra.mxu0 %v462
    %1680 = vmatprep.subr.bf16.mxu0 0
    %1681 = vmatpush2.bf16.msra.mxu0 %v461
    %1682 = vmatprep.subr.bf16.mxu0 0
    %1683 = vmatpush2.bf16.msra.mxu0 %v460
    %1684 = vmatprep.subr.bf16.mxu0 0
    %1685 = vmatpush2.bf16.msra.mxu0 %v459
    %1686 = vmatprep.subr.bf16.mxu0 0
    %1687 = vmatpush2.bf16.msra.mxu0 %v458
    %1688 = vmatprep.mubr.bf16.mxu0 %v1651
    %1689 = vmatmul.mubr.bf16.gmra.mxu0 %v1650
    %v1690 = vpop.f32.mrf.mxu0
    %v1691 = vadd.f32 %v256, %v1690
    %v1692 = vpop.f32.mrf.mxu0
    %v1693 = vpop.f32.mrf.mxu0
    %v1694 = vpop.f32.mrf.mxu0
    %1695 = vdwg.mxu0
    %1696 = vmatprep.subr.bf16.mxu0 0
    %1697 = vmatpush1.bf16.msra.mxu0 %v473
    %1698 = vmatprep.subr.bf16.mxu0 0
    %1699 = vmatpush1.bf16.msra.mxu0 %v472
    %1700 = vmatprep.subr.bf16.mxu0 0
    %1701 = vmatpush1.bf16.msra.mxu0 %v471
    %1702 = vmatprep.subr.bf16.mxu0 0
    %1703 = vmatpush1.bf16.msra.mxu0 %v470
    %1704 = vmatprep.subr.bf16.mxu0 0
    %1705 = vmatpush1.bf16.msra.mxu0 %v469
    %1706 = vmatprep.subr.bf16.mxu0 0
    %1707 = vmatpush1.bf16.msra.mxu0 %v468
    %1708 = vmatprep.subr.bf16.mxu0 0
    %1709 = vmatpush1.bf16.msra.mxu0 %v467
    %1710 = vmatprep.subr.bf16.mxu0 0
    %1711 = vmatpush1.bf16.msra.mxu0 %v466
    %1712 = vmatprep.subr.bf16.mxu0 0
    %1713 = vmatpush2.bf16.msra.mxu0 %v481
    %1714 = vmatprep.subr.bf16.mxu0 0
    %1715 = vmatpush2.bf16.msra.mxu0 %v480
    %1716 = vmatprep.subr.bf16.mxu0 0
    %1717 = vmatpush2.bf16.msra.mxu0 %v479
    %1718 = vmatprep.subr.bf16.mxu0 0
    %1719 = vmatpush2.bf16.msra.mxu0 %v478
    %1720 = vmatprep.subr.bf16.mxu0 0
    %1721 = vmatpush2.bf16.msra.mxu0 %v477
    %1722 = vmatprep.subr.bf16.mxu0 0
    %1723 = vmatpush2.bf16.msra.mxu0 %v476
    %1724 = vmatprep.subr.bf16.mxu0 0
    %1725 = vmatpush2.bf16.msra.mxu0 %v475
    %1726 = vmatprep.subr.bf16.mxu0 0
    %1727 = vmatpush2.bf16.msra.mxu0 %v474
    %1728 = vmatprep.mubr.bf16.mxu0 %v1653
    %1729 = vmatmul.mubr.bf16.gmra.mxu0 %v1652
    %v1730 = vpop.f32.mrf.mxu0
    %v1731 = vadd.f32 %v1691, %v1730
    %v1732 = vpop.f32.mrf.mxu0
    %v1733 = vpop.f32.mrf.mxu0
    %v1734 = vpop.f32.mrf.mxu0
    %1735 = vdwg.mxu0
    %1736 = vmatprep.subr.bf16.mxu0 0
    %1737 = vmatpush1.bf16.msra.mxu0 %v489
    %1738 = vmatprep.subr.bf16.mxu0 0
    %1739 = vmatpush1.bf16.msra.mxu0 %v488
    %1740 = vmatprep.subr.bf16.mxu0 0
    %1741 = vmatpush1.bf16.msra.mxu0 %v487
    %1742 = vmatprep.subr.bf16.mxu0 0
    %1743 = vmatpush1.bf16.msra.mxu0 %v486
    %1744 = vmatprep.subr.bf16.mxu0 0
    %1745 = vmatpush1.bf16.msra.mxu0 %v485
    %1746 = vmatprep.subr.bf16.mxu0 0
    %1747 = vmatpush1.bf16.msra.mxu0 %v484
    %1748 = vmatprep.subr.bf16.mxu0 0
    %1749 = vmatpush1.bf16.msra.mxu0 %v483
    %1750 = vmatprep.subr.bf16.mxu0 0
    %1751 = vmatpush1.bf16.msra.mxu0 %v482
    %1752 = vmatprep.subr.bf16.mxu0 0
    %1753 = vmatpush2.bf16.msra.mxu0 %v497
    %1754 = vmatprep.subr.bf16.mxu0 0
    %1755 = vmatpush2.bf16.msra.mxu0 %v496
    %1756 = vmatprep.subr.bf16.mxu0 0
    %1757 = vmatpush2.bf16.msra.mxu0 %v495
    %1758 = vmatprep.subr.bf16.mxu0 0
    %1759 = vmatpush2.bf16.msra.mxu0 %v494
    %1760 = vmatprep.subr.bf16.mxu0 0
    %1761 = vmatpush2.bf16.msra.mxu0 %v493
    %1762 = vmatprep.subr.bf16.mxu0 0
    %1763 = vmatpush2.bf16.msra.mxu0 %v492
    %1764 = vmatprep.subr.bf16.mxu0 0
    %1765 = vmatpush2.bf16.msra.mxu0 %v491
    %1766 = vmatprep.subr.bf16.mxu0 0
    %1767 = vmatpush2.bf16.msra.mxu0 %v490
    %1768 = vmatprep.mubr.bf16.mxu0 %v1655
    %1769 = vmatmul.mubr.bf16.gmra.mxu0 %v1654
    %v1770 = vpop.f32.mrf.mxu0
    %v1771 = vadd.f32 %v1731, %v1770
    %v1772 = vpop.f32.mrf.mxu0
    %v1773 = vpop.f32.mrf.mxu0
    %v1774 = vpop.f32.mrf.mxu0
    %1775 = vdwg.mxu0
    %1776 = vmax.xlane.f32.xlu0 %v1771
    %v1777 = vpop.xlane.xlu0 %1776
    %v1778 = vsub.f32 %v1771, %v1777
    %v1779 = vmul.f32 %v1778, 1.442695
    %v1780 = vpow.pop %v1779
    %1781 = vadd.xlane.f32.xlu0 %v1780
    %v1782 = vpop.xlane.xlu0 %1781
    %v1783 = vrcp.pop %v1782
    %v1784 = vmul.f32 %v1780, %v1783
    %v1785 = vsub.f32 %v1784, %v100
    %v1786 = vpack.c.bf16 %v1785, %v1785
    %1787 = vmatprep.subr.bf16.mxu0 %v864
    %1788 = vmatpush1.bf16.msra.mxu0 %v863
    %1789 = vmatprep.subr.bf16.mxu0 %v858
    %1790 = vmatpush1.bf16.msra.mxu0 %v857
    %1791 = vmatprep.subr.bf16.mxu0 %v852
    %1792 = vmatpush1.bf16.msra.mxu0 %v851
    %1793 = vmatprep.subr.bf16.mxu0 %v846
    %1794 = vmatpush1.bf16.msra.mxu0 %v845
    %1795 = vmatprep.subr.bf16.mxu0 %v840
    %1796 = vmatpush1.bf16.msra.mxu0 %v839
    %1797 = vmatprep.subr.bf16.mxu0 %v834
    %1798 = vmatpush1.bf16.msra.mxu0 %v833
    %1799 = vmatprep.subr.bf16.mxu0 %v828
    %1800 = vmatpush1.bf16.msra.mxu0 %v827
    %1801 = vmatprep.subr.bf16.mxu0 %v822
    %1802 = vmatpush1.bf16.msra.mxu0 %v821
    %1803 = vmatprep.subr.bf16.mxu0 0
    %1804 = vmatpush2.bf16.msra.mxu0 0
    %1805 = vmatprep.subr.bf16.mxu0 0
    %1806 = vmatpush2.bf16.msra.mxu0 0
    %1807 = vmatprep.subr.bf16.mxu0 0
    %1808 = vmatpush2.bf16.msra.mxu0 0
    %1809 = vmatprep.subr.bf16.mxu0 0
    %1810 = vmatpush2.bf16.msra.mxu0 0
    %1811 = vmatprep.subr.bf16.mxu0 0
    %1812 = vmatpush2.bf16.msra.mxu0 0
    %1813 = vmatprep.subr.bf16.mxu0 0
    %1814 = vmatpush2.bf16.msra.mxu0 0
    %1815 = vmatprep.subr.bf16.mxu0 0
    %1816 = vmatpush2.bf16.msra.mxu0 0
    %1817 = vmatprep.subr.bf16.mxu0 0
    %1818 = vmatpush2.bf16.msra.mxu0 0
    %1819 = vmatprep.mubr.bf16.mxu0 0
    %1820 = vmatmul.mubr.bf16.gmra.mxu0 %v1786
    %v1821 = vpop.f32.mrf.mxu0
    %v1822 = vadd.f32 0.0, %v1821
    %v1823 = vpop.f32.mrf.mxu0
    %v1824 = vadd.f32 0.0, %v1823
    %v1825 = vpop.f32.mrf.mxu0
    %v1826 = vpop.f32.mrf.mxu0
    %1827 = vdwg.mxu0
    %1828 = vmatprep.subr.bf16.mxu0 %v866
    %1829 = vmatpush1.bf16.msra.mxu0 %v865
    %1830 = vmatprep.subr.bf16.mxu0 %v860
    %1831 = vmatpush1.bf16.msra.mxu0 %v859
    %1832 = vmatprep.subr.bf16.mxu0 %v854
    %1833 = vmatpush1.bf16.msra.mxu0 %v853
    %1834 = vmatprep.subr.bf16.mxu0 %v848
    %1835 = vmatpush1.bf16.msra.mxu0 %v847
    %1836 = vmatprep.subr.bf16.mxu0 %v842
    %1837 = vmatpush1.bf16.msra.mxu0 %v841
    %1838 = vmatprep.subr.bf16.mxu0 %v836
    %1839 = vmatpush1.bf16.msra.mxu0 %v835
    %1840 = vmatprep.subr.bf16.mxu0 %v830
    %1841 = vmatpush1.bf16.msra.mxu0 %v829
    %1842 = vmatprep.subr.bf16.mxu0 %v824
    %1843 = vmatpush1.bf16.msra.mxu0 %v823
    %1844 = vmatprep.subr.bf16.mxu0 0
    %1845 = vmatpush2.bf16.msra.mxu0 0
    %1846 = vmatprep.subr.bf16.mxu0 0
    %1847 = vmatpush2.bf16.msra.mxu0 0
    %1848 = vmatprep.subr.bf16.mxu0 0
    %1849 = vmatpush2.bf16.msra.mxu0 0
    %1850 = vmatprep.subr.bf16.mxu0 0
    %1851 = vmatpush2.bf16.msra.mxu0 0
    %1852 = vmatprep.subr.bf16.mxu0 0
    %1853 = vmatpush2.bf16.msra.mxu0 0
    %1854 = vmatprep.subr.bf16.mxu0 0
    %1855 = vmatpush2.bf16.msra.mxu0 0
    %1856 = vmatprep.subr.bf16.mxu0 0
    %1857 = vmatpush2.bf16.msra.mxu0 0
    %1858 = vmatprep.subr.bf16.mxu0 0
    %1859 = vmatpush2.bf16.msra.mxu0 0
    %1860 = vmatprep.mubr.bf16.mxu0 0
    %1861 = vmatmul.mubr.bf16.gmra.mxu0 %v1786
    %v1862 = vpop.f32.mrf.mxu0
    %v1863 = vadd.f32 0.0, %v1862
    %v1864 = vpop.f32.mrf.mxu0
    %v1865 = vadd.f32 0.0, %v1864
    %v1866 = vpop.f32.mrf.mxu0
    %v1867 = vpop.f32.mrf.mxu0
    %1868 = vdwg.mxu0
    %1869 = vmatprep.subr.bf16.mxu0 %v868
    %1870 = vmatpush1.bf16.msra.mxu0 %v867
    %1871 = vmatprep.subr.bf16.mxu0 %v862
    %1872 = vmatpush1.bf16.msra.mxu0 %v861
    %1873 = vmatprep.subr.bf16.mxu0 %v856
    %1874 = vmatpush1.bf16.msra.mxu0 %v855
    %1875 = vmatprep.subr.bf16.mxu0 %v850
    %1876 = vmatpush1.bf16.msra.mxu0 %v849
    %1877 = vmatprep.subr.bf16.mxu0 %v844
    %1878 = vmatpush1.bf16.msra.mxu0 %v843
    %1879 = vmatprep.subr.bf16.mxu0 %v838
    %1880 = vmatpush1.bf16.msra.mxu0 %v837
    %1881 = vmatprep.subr.bf16.mxu0 %v832
    %1882 = vmatpush1.bf16.msra.mxu0 %v831
    %1883 = vmatprep.subr.bf16.mxu0 %v826
    %1884 = vmatpush1.bf16.msra.mxu0 %v825
    %1885 = vmatprep.subr.bf16.mxu0 0
    %1886 = vmatpush2.bf16.msra.mxu0 0
    %1887 = vmatprep.subr.bf16.mxu0 0
    %1888 = vmatpush2.bf16.msra.mxu0 0
    %1889 = vmatprep.subr.bf16.mxu0 0
    %1890 = vmatpush2.bf16.msra.mxu0 0
    %1891 = vmatprep.subr.bf16.mxu0 0
    %1892 = vmatpush2.bf16.msra.mxu0 0
    %1893 = vmatprep.subr.bf16.mxu0 0
    %1894 = vmatpush2.bf16.msra.mxu0 0
    %1895 = vmatprep.subr.bf16.mxu0 0
    %1896 = vmatpush2.bf16.msra.mxu0 0
    %1897 = vmatprep.subr.bf16.mxu0 0
    %1898 = vmatpush2.bf16.msra.mxu0 0
    %1899 = vmatprep.subr.bf16.mxu0 0
    %1900 = vmatpush2.bf16.msra.mxu0 0
    %1901 = vmatprep.mubr.bf16.mxu0 0
    %1902 = vmatmul.mubr.bf16.gmra.mxu0 %v1786
    %v1903 = vpop.f32.mrf.mxu0
    %v1904 = vadd.f32 0.0, %v1903
    %v1905 = vpop.f32.mrf.mxu0
    %v1906 = vadd.f32 0.0, %v1905
    %v1907 = vpop.f32.mrf.mxu0
    %v1908 = vpop.f32.mrf.mxu0
    %1909 = vdwg.mxu0
    %vm1910 = vcmp.ge.f32.partialorder %v1822, 0.0
    %vm1911 = vcmp.ge.f32.partialorder %v1824, 0.0
    %vm1912 = vcmp.ge.f32.partialorder %v1863, 0.0
    %vm1913 = vcmp.ge.f32.partialorder %v1865, 0.0
    %vm1914 = vcmp.ge.f32.partialorder %v1904, 0.0
    %vm1915 = vcmp.ge.f32.partialorder %v1906, 0.0
    %v1916 = vsel %vm1910, 0.007843138, -0.007843138
    %v1917 = vsel %vm1911, 0.007843138, -0.007843138
    %v1918 = vsel %vm1912, 0.007843138, -0.007843138
    %v1919 = vsel %vm1913, 0.007843138, -0.007843138
    %v1920 = vsel %vm1914, 0.007843138, -0.007843138
    %v1921 = vsel %vm1915, 0.007843138, -0.007843138
    %v1922 = vadd.f32 %v1644, %v1916
    %v1923 = vadd.f32 %v1645, %v1917
    %v1924 = vadd.f32 %v1646, %v1918
    %v1925 = vadd.f32 %v1647, %v1919
    %v1926 = vadd.f32 %v1648, %v1920
    %v1927 = vadd.f32 %v1649, %v1921
    %v1928 = vmax.f32 %v1922, %v88
    %v1929 = vmax.f32 %v1923, %v89
    %v1930 = vmax.f32 %v1924, %v90
    %v1931 = vmax.f32 %v1925, %v91
    %v1932 = vmax.f32 %v1926, %v92
    %v1933 = vmax.f32 %v1927, %v93
    %v1934 = vmin.f32 %v1928, %v94
    %v1935 = vmin.f32 %v1929, %v95
    %v1936 = vmin.f32 %v1930, %v96
    %v1937 = vmin.f32 %v1931, %v97
    %v1938 = vmin.f32 %v1932, %v98
    %v1939 = vmin.f32 %v1933, %v99
    %v1940 = vpack.c.bf16 %v1934, %v1934
    %v1941 = vpack.c.bf16 %v1935, %v1935
    %v1942 = vpack.c.bf16 %v1936, %v1936
    %v1943 = vpack.c.bf16 %v1937, %v1937
    %v1944 = vpack.c.bf16 %v1938, %v1938
    %v1945 = vpack.c.bf16 %v1939, %v1939
    %1946 = vmatprep.subr.bf16.mxu0 0
    %1947 = vmatpush1.bf16.msra.mxu0 %v457
    %1948 = vmatprep.subr.bf16.mxu0 0
    %1949 = vmatpush1.bf16.msra.mxu0 %v456
    %1950 = vmatprep.subr.bf16.mxu0 0
    %1951 = vmatpush1.bf16.msra.mxu0 %v455
    %1952 = vmatprep.subr.bf16.mxu0 0
    %1953 = vmatpush1.bf16.msra.mxu0 %v454
    %1954 = vmatprep.subr.bf16.mxu0 0
    %1955 = vmatpush1.bf16.msra.mxu0 %v453
    %1956 = vmatprep.subr.bf16.mxu0 0
    %1957 = vmatpush1.bf16.msra.mxu0 %v452
    %1958 = vmatprep.subr.bf16.mxu0 0
    %1959 = vmatpush1.bf16.msra.mxu0 %v451
    %1960 = vmatprep.subr.bf16.mxu0 0
    %1961 = vmatpush1.bf16.msra.mxu0 %v450
    %1962 = vmatprep.subr.bf16.mxu0 0
    %1963 = vmatpush2.bf16.msra.mxu0 %v465
    %1964 = vmatprep.subr.bf16.mxu0 0
    %1965 = vmatpush2.bf16.msra.mxu0 %v464
    %1966 = vmatprep.subr.bf16.mxu0 0
    %1967 = vmatpush2.bf16.msra.mxu0 %v463
    %1968 = vmatprep.subr.bf16.mxu0 0
    %1969 = vmatpush2.bf16.msra.mxu0 %v462
    %1970 = vmatprep.subr.bf16.mxu0 0
    %1971 = vmatpush2.bf16.msra.mxu0 %v461
    %1972 = vmatprep.subr.bf16.mxu0 0
    %1973 = vmatpush2.bf16.msra.mxu0 %v460
    %1974 = vmatprep.subr.bf16.mxu0 0
    %1975 = vmatpush2.bf16.msra.mxu0 %v459
    %1976 = vmatprep.subr.bf16.mxu0 0
    %1977 = vmatpush2.bf16.msra.mxu0 %v458
    %1978 = vmatprep.mubr.bf16.mxu0 %v1941
    %1979 = vmatmul.mubr.bf16.gmra.mxu0 %v1940
    %v1980 = vpop.f32.mrf.mxu0
    %v1981 = vadd.f32 %v256, %v1980
    %v1982 = vpop.f32.mrf.mxu0
    %v1983 = vpop.f32.mrf.mxu0
    %v1984 = vpop.f32.mrf.mxu0
    %1985 = vdwg.mxu0
    %1986 = vmatprep.subr.bf16.mxu0 0
    %1987 = vmatpush1.bf16.msra.mxu0 %v473
    %1988 = vmatprep.subr.bf16.mxu0 0
    %1989 = vmatpush1.bf16.msra.mxu0 %v472
    %1990 = vmatprep.subr.bf16.mxu0 0
    %1991 = vmatpush1.bf16.msra.mxu0 %v471
    %1992 = vmatprep.subr.bf16.mxu0 0
    %1993 = vmatpush1.bf16.msra.mxu0 %v470
    %1994 = vmatprep.subr.bf16.mxu0 0
    %1995 = vmatpush1.bf16.msra.mxu0 %v469
    %1996 = vmatprep.subr.bf16.mxu0 0
    %1997 = vmatpush1.bf16.msra.mxu0 %v468
    %1998 = vmatprep.subr.bf16.mxu0 0
    %1999 = vmatpush1.bf16.msra.mxu0 %v467
    %2000 = vmatprep.subr.bf16.mxu0 0
    %2001 = vmatpush1.bf16.msra.mxu0 %v466
    %2002 = vmatprep.subr.bf16.mxu0 0
    %2003 = vmatpush2.bf16.msra.mxu0 %v481
    %2004 = vmatprep.subr.bf16.mxu0 0
    %2005 = vmatpush2.bf16.msra.mxu0 %v480
    %2006 = vmatprep.subr.bf16.mxu0 0
    %2007 = vmatpush2.bf16.msra.mxu0 %v479
    %2008 = vmatprep.subr.bf16.mxu0 0
    %2009 = vmatpush2.bf16.msra.mxu0 %v478
    %2010 = vmatprep.subr.bf16.mxu0 0
    %2011 = vmatpush2.bf16.msra.mxu0 %v477
    %2012 = vmatprep.subr.bf16.mxu0 0
    %2013 = vmatpush2.bf16.msra.mxu0 %v476
    %2014 = vmatprep.subr.bf16.mxu0 0
    %2015 = vmatpush2.bf16.msra.mxu0 %v475
    %2016 = vmatprep.subr.bf16.mxu0 0
    %2017 = vmatpush2.bf16.msra.mxu0 %v474
    %2018 = vmatprep.mubr.bf16.mxu0 %v1943
    %2019 = vmatmul.mubr.bf16.gmra.mxu0 %v1942
    %v2020 = vpop.f32.mrf.mxu0
    %v2021 = vadd.f32 %v1981, %v2020
    %v2022 = vpop.f32.mrf.mxu0
    %v2023 = vpop.f32.mrf.mxu0
    %v2024 = vpop.f32.mrf.mxu0
    %2025 = vdwg.mxu0
    %2026 = vmatprep.subr.bf16.mxu0 0
    %2027 = vmatpush1.bf16.msra.mxu0 %v489
    %2028 = vmatprep.subr.bf16.mxu0 0
    %2029 = vmatpush1.bf16.msra.mxu0 %v488
    %2030 = vmatprep.subr.bf16.mxu0 0
    %2031 = vmatpush1.bf16.msra.mxu0 %v487
    %2032 = vmatprep.subr.bf16.mxu0 0
    %2033 = vmatpush1.bf16.msra.mxu0 %v486
    %2034 = vmatprep.subr.bf16.mxu0 0
    %2035 = vmatpush1.bf16.msra.mxu0 %v485
    %2036 = vmatprep.subr.bf16.mxu0 0
    %2037 = vmatpush1.bf16.msra.mxu0 %v484
    %2038 = vmatprep.subr.bf16.mxu0 0
    %2039 = vmatpush1.bf16.msra.mxu0 %v483
    %2040 = vmatprep.subr.bf16.mxu0 0
    %2041 = vmatpush1.bf16.msra.mxu0 %v482
    %2042 = vmatprep.subr.bf16.mxu0 0
    %2043 = vmatpush2.bf16.msra.mxu0 %v497
    %2044 = vmatprep.subr.bf16.mxu0 0
    %2045 = vmatpush2.bf16.msra.mxu0 %v496
    %2046 = vmatprep.subr.bf16.mxu0 0
    %2047 = vmatpush2.bf16.msra.mxu0 %v495
    %2048 = vmatprep.subr.bf16.mxu0 0
    %2049 = vmatpush2.bf16.msra.mxu0 %v494
    %2050 = vmatprep.subr.bf16.mxu0 0
    %2051 = vmatpush2.bf16.msra.mxu0 %v493
    %2052 = vmatprep.subr.bf16.mxu0 0
    %2053 = vmatpush2.bf16.msra.mxu0 %v492
    %2054 = vmatprep.subr.bf16.mxu0 0
    %2055 = vmatpush2.bf16.msra.mxu0 %v491
    %2056 = vmatprep.subr.bf16.mxu0 0
    %2057 = vmatpush2.bf16.msra.mxu0 %v490
    %2058 = vmatprep.mubr.bf16.mxu0 %v1945
    %2059 = vmatmul.mubr.bf16.gmra.mxu0 %v1944
    %v2060 = vpop.f32.mrf.mxu0
    %v2061 = vadd.f32 %v2021, %v2060
    %v2062 = vpop.f32.mrf.mxu0
    %v2063 = vpop.f32.mrf.mxu0
    %v2064 = vpop.f32.mrf.mxu0
    %2065 = vdwg.mxu0
    %2066 = vmax.xlane.f32.xlu0 %v2061
    %v2067 = vpop.xlane.xlu0 %2066
    %v2068 = vsub.f32 %v2061, %v2067
    %v2069 = vmul.f32 %v2068, 1.442695
    %v2070 = vpow.pop %v2069
    %2071 = vadd.xlane.f32.xlu0 %v2070
    %v2072 = vpop.xlane.xlu0 %2071
    %v2073 = vrcp.pop %v2072
    %v2074 = vmul.f32 %v2070, %v2073
    %v2075 = vsub.f32 %v2074, %v100
    %v2076 = vpack.c.bf16 %v2075, %v2075
    %2077 = vmatprep.subr.bf16.mxu0 %v864
    %2078 = vmatpush1.bf16.msra.mxu0 %v863
    %2079 = vmatprep.subr.bf16.mxu0 %v858
    %2080 = vmatpush1.bf16.msra.mxu0 %v857
    %2081 = vmatprep.subr.bf16.mxu0 %v852
    %2082 = vmatpush1.bf16.msra.mxu0 %v851
    %2083 = vmatprep.subr.bf16.mxu0 %v846
    %2084 = vmatpush1.bf16.msra.mxu0 %v845
    %2085 = vmatprep.subr.bf16.mxu0 %v840
    %2086 = vmatpush1.bf16.msra.mxu0 %v839
    %2087 = vmatprep.subr.bf16.mxu0 %v834
    %2088 = vmatpush1.bf16.msra.mxu0 %v833
    %2089 = vmatprep.subr.bf16.mxu0 %v828
    %2090 = vmatpush1.bf16.msra.mxu0 %v827
    %2091 = vmatprep.subr.bf16.mxu0 %v822
    %2092 = vmatpush1.bf16.msra.mxu0 %v821
    %2093 = vmatprep.subr.bf16.mxu0 0
    %2094 = vmatpush2.bf16.msra.mxu0 0
    %2095 = vmatprep.subr.bf16.mxu0 0
    %2096 = vmatpush2.bf16.msra.mxu0 0
    %2097 = vmatprep.subr.bf16.mxu0 0
    %2098 = vmatpush2.bf16.msra.mxu0 0
    %2099 = vmatprep.subr.bf16.mxu0 0
    %2100 = vmatpush2.bf16.msra.mxu0 0
    %2101 = vmatprep.subr.bf16.mxu0 0
    %2102 = vmatpush2.bf16.msra.mxu0 0
    %2103 = vmatprep.subr.bf16.mxu0 0
    %2104 = vmatpush2.bf16.msra.mxu0 0
    %2105 = vmatprep.subr.bf16.mxu0 0
    %2106 = vmatpush2.bf16.msra.mxu0 0
    %2107 = vmatprep.subr.bf16.mxu0 0
    %2108 = vmatpush2.bf16.msra.mxu0 0
    %2109 = vmatprep.mubr.bf16.mxu0 0
    %2110 = vmatmul.mubr.bf16.gmra.mxu0 %v2076
    %v2111 = vpop.f32.mrf.mxu0
    %v2112 = vadd.f32 0.0, %v2111
    %v2113 = vpop.f32.mrf.mxu0
    %v2114 = vadd.f32 0.0, %v2113
    %v2115 = vpop.f32.mrf.mxu0
    %v2116 = vpop.f32.mrf.mxu0
    %2117 = vdwg.mxu0
    %2118 = vmatprep.subr.bf16.mxu0 %v866
    %2119 = vmatpush1.bf16.msra.mxu0 %v865
    %2120 = vmatprep.subr.bf16.mxu0 %v860
    %2121 = vmatpush1.bf16.msra.mxu0 %v859
    %2122 = vmatprep.subr.bf16.mxu0 %v854
    %2123 = vmatpush1.bf16.msra.mxu0 %v853
    %2124 = vmatprep.subr.bf16.mxu0 %v848
    %2125 = vmatpush1.bf16.msra.mxu0 %v847
    %2126 = vmatprep.subr.bf16.mxu0 %v842
    %2127 = vmatpush1.bf16.msra.mxu0 %v841
    %2128 = vmatprep.subr.bf16.mxu0 %v836
    %2129 = vmatpush1.bf16.msra.mxu0 %v835
    %2130 = vmatprep.subr.bf16.mxu0 %v830
    %2131 = vmatpush1.bf16.msra.mxu0 %v829
    %2132 = vmatprep.subr.bf16.mxu0 %v824
    %2133 = vmatpush1.bf16.msra.mxu0 %v823
    %2134 = vmatprep.subr.bf16.mxu0 0
    %2135 = vmatpush2.bf16.msra.mxu0 0
    %2136 = vmatprep.subr.bf16.mxu0 0
    %2137 = vmatpush2.bf16.msra.mxu0 0
    %2138 = vmatprep.subr.bf16.mxu0 0
    %2139 = vmatpush2.bf16.msra.mxu0 0
    %2140 = vmatprep.subr.bf16.mxu0 0
    %2141 = vmatpush2.bf16.msra.mxu0 0
    %2142 = vmatprep.subr.bf16.mxu0 0
    %2143 = vmatpush2.bf16.msra.mxu0 0
    %2144 = vmatprep.subr.bf16.mxu0 0
    %2145 = vmatpush2.bf16.msra.mxu0 0
    %2146 = vmatprep.subr.bf16.mxu0 0
    %2147 = vmatpush2.bf16.msra.mxu0 0
    %2148 = vmatprep.subr.bf16.mxu0 0
    %2149 = vmatpush2.bf16.msra.mxu0 0
    %2150 = vmatprep.mubr.bf16.mxu0 0
    %2151 = vmatmul.mubr.bf16.gmra.mxu0 %v2076
    %v2152 = vpop.f32.mrf.mxu0
    %v2153 = vadd.f32 0.0, %v2152
    %v2154 = vpop.f32.mrf.mxu0
    %v2155 = vadd.f32 0.0, %v2154
    %v2156 = vpop.f32.mrf.mxu0
    %v2157 = vpop.f32.mrf.mxu0
    %2158 = vdwg.mxu0
    %2159 = vmatprep.subr.bf16.mxu0 %v868
    %2160 = vmatpush1.bf16.msra.mxu0 %v867
    %2161 = vmatprep.subr.bf16.mxu0 %v862
    %2162 = vmatpush1.bf16.msra.mxu0 %v861
    %2163 = vmatprep.subr.bf16.mxu0 %v856
    %2164 = vmatpush1.bf16.msra.mxu0 %v855
    %2165 = vmatprep.subr.bf16.mxu0 %v850
    %2166 = vmatpush1.bf16.msra.mxu0 %v849
    %2167 = vmatprep.subr.bf16.mxu0 %v844
    %2168 = vmatpush1.bf16.msra.mxu0 %v843
    %2169 = vmatprep.subr.bf16.mxu0 %v838
    %2170 = vmatpush1.bf16.msra.mxu0 %v837
    %2171 = vmatprep.subr.bf16.mxu0 %v832
    %2172 = vmatpush1.bf16.msra.mxu0 %v831
    %2173 = vmatprep.subr.bf16.mxu0 %v826
    %2174 = vmatpush1.bf16.msra.mxu0 %v825
    %2175 = vmatprep.subr.bf16.mxu0 0
    %2176 = vmatpush2.bf16.msra.mxu0 0
    %2177 = vmatprep.subr.bf16.mxu0 0
    %2178 = vmatpush2.bf16.msra.mxu0 0
    %2179 = vmatprep.subr.bf16.mxu0 0
    %2180 = vmatpush2.bf16.msra.mxu0 0
    %2181 = vmatprep.subr.bf16.mxu0 0
    %2182 = vmatpush2.bf16.msra.mxu0 0
    %2183 = vmatprep.subr.bf16.mxu0 0
    %2184 = vmatpush2.bf16.msra.mxu0 0
    %2185 = vmatprep.subr.bf16.mxu0 0
    %2186 = vmatpush2.bf16.msra.mxu0 0
    %2187 = vmatprep.subr.bf16.mxu0 0
    %2188 = vmatpush2.bf16.msra.mxu0 0
    %2189 = vmatprep.subr.bf16.mxu0 0
    %2190 = vmatpush2.bf16.msra.mxu0 0
    %2191 = vmatprep.mubr.bf16.mxu0 0
    %2192 = vmatmul.mubr.bf16.gmra.mxu0 %v2076
    %v2193 = vpop.f32.mrf.mxu0
    %v2194 = vadd.f32 0.0, %v2193
    %v2195 = vpop.f32.mrf.mxu0
    %v2196 = vadd.f32 0.0, %v2195
    %v2197 = vpop.f32.mrf.mxu0
    %v2198 = vpop.f32.mrf.mxu0
    %2199 = vdwg.mxu0
    %vm2200 = vcmp.ge.f32.partialorder %v2112, 0.0
    %vm2201 = vcmp.ge.f32.partialorder %v2114, 0.0
    %vm2202 = vcmp.ge.f32.partialorder %v2153, 0.0
    %vm2203 = vcmp.ge.f32.partialorder %v2155, 0.0
    %vm2204 = vcmp.ge.f32.partialorder %v2194, 0.0
    %vm2205 = vcmp.ge.f32.partialorder %v2196, 0.0
    %v2206 = vsel %vm2200, 0.007843138, -0.007843138
    %v2207 = vsel %vm2201, 0.007843138, -0.007843138
    %v2208 = vsel %vm2202, 0.007843138, -0.007843138
    %v2209 = vsel %vm2203, 0.007843138, -0.007843138
    %v2210 = vsel %vm2204, 0.007843138, -0.007843138
    %v2211 = vsel %vm2205, 0.007843138, -0.007843138
    %v2212 = vadd.f32 %v1934, %v2206
    %v2213 = vadd.f32 %v1935, %v2207
    %v2214 = vadd.f32 %v1936, %v2208
    %v2215 = vadd.f32 %v1937, %v2209
    %v2216 = vadd.f32 %v1938, %v2210
    %v2217 = vadd.f32 %v1939, %v2211
    %v2218 = vmax.f32 %v2212, %v88
    %v2219 = vmax.f32 %v2213, %v89
    %v2220 = vmax.f32 %v2214, %v90
    %v2221 = vmax.f32 %v2215, %v91
    %v2222 = vmax.f32 %v2216, %v92
    %v2223 = vmax.f32 %v2217, %v93
    %v2224 = vmin.f32 %v2218, %v94
    %v2225 = vmin.f32 %v2219, %v95
    %v2226 = vmin.f32 %v2220, %v96
    %v2227 = vmin.f32 %v2221, %v97
    %v2228 = vmin.f32 %v2222, %v98
    %v2229 = vmin.f32 %v2223, %v99
    %v2230 = vpack.c.bf16 %v2224, %v2224
    %v2231 = vpack.c.bf16 %v2225, %v2225
    %v2232 = vpack.c.bf16 %v2226, %v2226
    %v2233 = vpack.c.bf16 %v2227, %v2227
    %v2234 = vpack.c.bf16 %v2228, %v2228
    %v2235 = vpack.c.bf16 %v2229, %v2229
    %2236 = vmatprep.subr.bf16.mxu0 0
    %2237 = vmatpush1.bf16.msra.mxu0 %v457
    %2238 = vmatprep.subr.bf16.mxu0 0
    %2239 = vmatpush1.bf16.msra.mxu0 %v456
    %2240 = vmatprep.subr.bf16.mxu0 0
    %2241 = vmatpush1.bf16.msra.mxu0 %v455
    %2242 = vmatprep.subr.bf16.mxu0 0
    %2243 = vmatpush1.bf16.msra.mxu0 %v454
    %2244 = vmatprep.subr.bf16.mxu0 0
    %2245 = vmatpush1.bf16.msra.mxu0 %v453
    %2246 = vmatprep.subr.bf16.mxu0 0
    %2247 = vmatpush1.bf16.msra.mxu0 %v452
    %2248 = vmatprep.subr.bf16.mxu0 0
    %2249 = vmatpush1.bf16.msra.mxu0 %v451
    %2250 = vmatprep.subr.bf16.mxu0 0
    %2251 = vmatpush1.bf16.msra.mxu0 %v450
    %2252 = vmatprep.subr.bf16.mxu0 0
    %2253 = vmatpush2.bf16.msra.mxu0 %v465
    %2254 = vmatprep.subr.bf16.mxu0 0
    %2255 = vmatpush2.bf16.msra.mxu0 %v464
    %2256 = vmatprep.subr.bf16.mxu0 0
    %2257 = vmatpush2.bf16.msra.mxu0 %v463
    %2258 = vmatprep.subr.bf16.mxu0 0
    %2259 = vmatpush2.bf16.msra.mxu0 %v462
    %2260 = vmatprep.subr.bf16.mxu0 0
    %2261 = vmatpush2.bf16.msra.mxu0 %v461
    %2262 = vmatprep.subr.bf16.mxu0 0
    %2263 = vmatpush2.bf16.msra.mxu0 %v460
    %2264 = vmatprep.subr.bf16.mxu0 0
    %2265 = vmatpush2.bf16.msra.mxu0 %v459
    %2266 = vmatprep.subr.bf16.mxu0 0
    %2267 = vmatpush2.bf16.msra.mxu0 %v458
    %2268 = vmatprep.mubr.bf16.mxu0 %v2231
    %2269 = vmatmul.mubr.bf16.gmra.mxu0 %v2230
    %v2270 = vpop.f32.mrf.mxu0
    %v2271 = vadd.f32 %v256, %v2270
    %v2272 = vpop.f32.mrf.mxu0
    %v2273 = vpop.f32.mrf.mxu0
    %v2274 = vpop.f32.mrf.mxu0
    %2275 = vdwg.mxu0
    %2276 = vmatprep.subr.bf16.mxu0 0
    %2277 = vmatpush1.bf16.msra.mxu0 %v473
    %2278 = vmatprep.subr.bf16.mxu0 0
    %2279 = vmatpush1.bf16.msra.mxu0 %v472
    %2280 = vmatprep.subr.bf16.mxu0 0
    %2281 = vmatpush1.bf16.msra.mxu0 %v471
    %2282 = vmatprep.subr.bf16.mxu0 0
    %2283 = vmatpush1.bf16.msra.mxu0 %v470
    %2284 = vmatprep.subr.bf16.mxu0 0
    %2285 = vmatpush1.bf16.msra.mxu0 %v469
    %2286 = vmatprep.subr.bf16.mxu0 0
    %2287 = vmatpush1.bf16.msra.mxu0 %v468
    %2288 = vmatprep.subr.bf16.mxu0 0
    %2289 = vmatpush1.bf16.msra.mxu0 %v467
    %2290 = vmatprep.subr.bf16.mxu0 0
    %2291 = vmatpush1.bf16.msra.mxu0 %v466
    %2292 = vmatprep.subr.bf16.mxu0 0
    %2293 = vmatpush2.bf16.msra.mxu0 %v481
    %2294 = vmatprep.subr.bf16.mxu0 0
    %2295 = vmatpush2.bf16.msra.mxu0 %v480
    %2296 = vmatprep.subr.bf16.mxu0 0
    %2297 = vmatpush2.bf16.msra.mxu0 %v479
    %2298 = vmatprep.subr.bf16.mxu0 0
    %2299 = vmatpush2.bf16.msra.mxu0 %v478
    %2300 = vmatprep.subr.bf16.mxu0 0
    %2301 = vmatpush2.bf16.msra.mxu0 %v477
    %2302 = vmatprep.subr.bf16.mxu0 0
    %2303 = vmatpush2.bf16.msra.mxu0 %v476
    %2304 = vmatprep.subr.bf16.mxu0 0
    %2305 = vmatpush2.bf16.msra.mxu0 %v475
    %2306 = vmatprep.subr.bf16.mxu0 0
    %2307 = vmatpush2.bf16.msra.mxu0 %v474
    %2308 = vmatprep.mubr.bf16.mxu0 %v2233
    %2309 = vmatmul.mubr.bf16.gmra.mxu0 %v2232
    %v2310 = vpop.f32.mrf.mxu0
    %v2311 = vadd.f32 %v2271, %v2310
    %v2312 = vpop.f32.mrf.mxu0
    %v2313 = vpop.f32.mrf.mxu0
    %v2314 = vpop.f32.mrf.mxu0
    %2315 = vdwg.mxu0
    %2316 = vmatprep.subr.bf16.mxu0 0
    %2317 = vmatpush1.bf16.msra.mxu0 %v489
    %2318 = vmatprep.subr.bf16.mxu0 0
    %2319 = vmatpush1.bf16.msra.mxu0 %v488
    %2320 = vmatprep.subr.bf16.mxu0 0
    %2321 = vmatpush1.bf16.msra.mxu0 %v487
    %2322 = vmatprep.subr.bf16.mxu0 0
    %2323 = vmatpush1.bf16.msra.mxu0 %v486
    %2324 = vmatprep.subr.bf16.mxu0 0
    %2325 = vmatpush1.bf16.msra.mxu0 %v485
    %2326 = vmatprep.subr.bf16.mxu0 0
    %2327 = vmatpush1.bf16.msra.mxu0 %v484
    %2328 = vmatprep.subr.bf16.mxu0 0
    %2329 = vmatpush1.bf16.msra.mxu0 %v483
    %2330 = vmatprep.subr.bf16.mxu0 0
    %2331 = vmatpush1.bf16.msra.mxu0 %v482
    %2332 = vmatprep.subr.bf16.mxu0 0
    %2333 = vmatpush2.bf16.msra.mxu0 %v497
    %2334 = vmatprep.subr.bf16.mxu0 0
    %2335 = vmatpush2.bf16.msra.mxu0 %v496
    %2336 = vmatprep.subr.bf16.mxu0 0
    %2337 = vmatpush2.bf16.msra.mxu0 %v495
    %2338 = vmatprep.subr.bf16.mxu0 0
    %2339 = vmatpush2.bf16.msra.mxu0 %v494
    %2340 = vmatprep.subr.bf16.mxu0 0
    %2341 = vmatpush2.bf16.msra.mxu0 %v493
    %2342 = vmatprep.subr.bf16.mxu0 0
    %2343 = vmatpush2.bf16.msra.mxu0 %v492
    %2344 = vmatprep.subr.bf16.mxu0 0
    %2345 = vmatpush2.bf16.msra.mxu0 %v491
    %2346 = vmatprep.subr.bf16.mxu0 0
    %2347 = vmatpush2.bf16.msra.mxu0 %v490
    %2348 = vmatprep.mubr.bf16.mxu0 %v2235
    %2349 = vmatmul.mubr.bf16.gmra.mxu0 %v2234
    %v2350 = vpop.f32.mrf.mxu0
    %v2351 = vadd.f32 %v2311, %v2350
    %v2352 = vpop.f32.mrf.mxu0
    %v2353 = vpop.f32.mrf.mxu0
    %v2354 = vpop.f32.mrf.mxu0
    %2355 = vdwg.mxu0
    %2356 = vst [vmem:[#allocation10] sm:$0xff] %v2351
    %2357 = vst [vmem:[#allocation11] sm:$0xff] %v2224
    %2358 = vst [vmem:[#allocation11 + $0x8] sm:$0xff] %v2225
    %2359 = vst [vmem:[#allocation11 + $0x10] sm:$0xff] %v2226
    %2360 = vst [vmem:[#allocation11 + $0x18] sm:$0xff] %v2227
    %2361 = vst [vmem:[#allocation11 + $0x20] sm:$0xff] %v2228
    %2362 = vst [vmem:[#allocation11 + $0x28] sm:$0xff] %v2229
    // Predicated region
    $region46: #{tpu_custom_call.1} parent=1 // pred_check
      _
    $region47: #{tpu_custom_call.1} parent=1 // pred_check_branch
      %2364 = sbr.rel (0) target = $region49
    $region48: #{tpu_custom_call.1} parent=1 // pred_region
      %s2366 = ssub.s32 128, 128
      %2367 = vsyncadd [#allocation4], %s2366
      %s2369 = sshll.u32 [#allocation10], 4
      %s2370 = int_to_ptr.vmem [resolvable:$true] %s2369
      %2372 = dma.vmem_to_hbm [thread:$0]  %s2370, 128, %s7, [#allocation4]
    $region49: #{tpu_custom_call.1} parent=1 // pred_fallthru
      _
    // Predicated region
    $region50: #{tpu_custom_call.1} parent=1 // pred_check
      _
    $region51: #{tpu_custom_call.1} parent=1 // pred_check_branch
      %2374 = sbr.rel (0) target = $region53
    $region52: #{tpu_custom_call.1} parent=1 // pred_region
      %s2376 = ssub.s32 768, 768
      %2377 = vsyncadd [#allocation12], %s2376
      %s2379 = sshll.u32 [#allocation11], 4
      %s2380 = int_to_ptr.vmem [resolvable:$true] %s2379
      %2382 = dma.vmem_to_hbm [thread:$0]  %s2380, 768, %s8, [#allocation12]
    $region53: #{tpu_custom_call.1} parent=1 // pred_fallthru
      _
    // Predicated region
    $region54: #{tpu_custom_call.1} parent=1 // pred_check
      _
    $region55: #{tpu_custom_call.1} parent=1 // pred_check_branch
      %2384 = sbr.rel (0) target = $region57
    $region56: #{tpu_custom_call.1} parent=1 // pred_region
      %2385 = dma.done [#allocation4], 128
    $region57: #{tpu_custom_call.1} parent=1 // pred_fallthru
      _
    // Predicated region
    $region58: #{tpu_custom_call.1} parent=1 // pred_check
      _
    $region59: #{tpu_custom_call.1} parent=1 // pred_check_branch
      %2387 = sbr.rel (0) target = $region61
    $region60: #{tpu_custom_call.1} parent=1 // pred_region
      %2388 = dma.done [#allocation12], 768
    $region61: #{tpu_custom_call.1} parent=1 // pred_fallthru
      _
    %2389 = vsyncpa [#allocation3], 1
    %2390 = vsyncpa [#allocation6], 1
    %2391 = vsyncpa [#allocation9], 1
    %2392 = vsyncpa [#allocation4], 1
    %2393 = vsyncpa [#allocation12], 1

</llo_original>
